<compile_context>
chip_gen: v6e
topology: v6e:2x2x1
jax: 0.10.0
libtpu: 0.0.40
codegen_flags: <defaults>
</compile_context>

<pallas_src>
import numpy as np
import jax
import jax.numpy as jnp
from jax.experimental import pallas as pl
from jax.experimental.pallas import tpu as pltpu


def _round_up(x, m):
    return (x + m - 1) // m * m


# --------------------------------------------------------------------------
# One-time (per model) preparation: tap masks + packed conv weights.
# --------------------------------------------------------------------------
def make_tap_masks(H, W, KH, KW):
    """(KT, H*W) f32: 1.0 where conv tap (di, dj) reads inside the image."""
    KT = KH * KW
    PH, PW = KH // 2, KW // 2
    rr = np.arange(H * W) // W
    cc = np.arange(H * W) % W
    m = np.zeros((KT, H * W), np.float32)
    for tap in range(KT):
        di, dj = tap // KW, tap % KW
        r2, c2 = rr + di - PH, cc + dj - PW
        m[tap] = ((r2 >= 0) & (r2 < H) & (c2 >= 0) & (c2 < W)).astype(np.float32)
    return jnp.asarray(m)


def pack_convgru_layer(params, Cin, Ch, kernel_size):
    """Repack PyTorch Conv2d weights (O, Cin+Ch, KH, KW) into the im2col-matmul
    layout used by the kernel, with the bias folded into column 0 (ones row) and
    x taps padded to 8 channels (zero weight columns).  Done ONCE per model."""
    KH, KW = kernel_size
    KT = KH * KW
    Cxp = _round_up(Cin, 8)                       # sublane-aligned x tap block
    Ktot = 8 + KT * Cxp + KT * Ch                 # [bias(8) | x taps | h taps]

    def pack(w, b):
        O = w.shape[0]
        wx = jnp.transpose(w[:, :Cin], (0, 2, 3, 1)).reshape(O, KT, Cin)
        wh = jnp.transpose(w[:, Cin:], (0, 2, 3, 1)).reshape(O, KT, Ch)
        xblk = jnp.zeros((O, KT, Cxp), jnp.float32).at[:, :, :Cin].set(wx)
        bblk = jnp.zeros((O, 8), jnp.float32).at[:, 0].set(b)
        return jnp.concatenate(
            [bblk, xblk.reshape(O, KT * Cxp), wh.reshape(O, KT * Ch)],
            axis=1).astype(jnp.bfloat16)

    return dict(
        wg=pack(params['wg'], params['bg']),
        wc=pack(params['wc'], params['bc']),
        Cin=Cin, Ch=Ch, Gout=params['wg'].shape[0], Cxp=Cxp, Ktot=Ktot,
    )


# --------------------------------------------------------------------------
# Pallas kernel: one layer, whole sequence (grid = (B, T)).
# --------------------------------------------------------------------------
def _make_layer_kernel(H, W, KH, KW, Cin, Ch, Gout, Cxp, cell_type):
    HW = H * W
    KT = KH * KW
    PH, PW = KH // 2, KW // 2
    XBASE = 8                   # rows [0, 8): bias block (row 0 = ones)
    HBASE = 8 + KT * Cxp        # start of the h-tap region

    def kernel(x_ref, h0_ref, wg_ref, wc_ref, mask_ref, out_ref, h_ref, col_ref):
        t = pl.program_id(1)

        # ---- once per sequence (t == 0): init resident state --------------
        @pl.when(t == 0)
        def _init():
            # Bias ones row + zero pad rows are written once and never again
            # (their weight columns are zero / carry the bias).
            col_ref[0:1, :] = jnp.ones((1, HW), jnp.bfloat16)
            col_ref[1:8, :] = jnp.zeros((7, HW), jnp.bfloat16)
            if Cxp > Cin:
                for tap in range(KT):
                    off = XBASE + tap * Cxp + Cin
                    col_ref[off:off + (Cxp - Cin), :] = jnp.zeros(
                        (Cxp - Cin, HW), jnp.bfloat16)
            h_ref[...] = h0_ref[0].astype(jnp.float32)

        def fill_taps(val, base, stride, nrows):
            # Write the KT shifted taps of `val` (nrows, HW f32) into the bf16
            # col stack.  pltpu.roll = XLU lane rotation (idle slot); boundary
            # wrap is killed by the resident per-tap mask.  Exactly one
            # f32->bf16 cast per tap, at the store.
            for tap in range(KT):
                di, dj = tap // KW, tap % KW
                delta = (di - PH) * W + (dj - PW)
                if delta == 0:                        # center tap: no roll/mask
                    v = val
                else:
                    v = pltpu.roll(val, shift=(-delta) % HW, axis=1)
                    v = v * mask_ref[tap:tap + 1, :]
                off = base + tap * stride
                col_ref[off:off + nrows, :] = v.astype(jnp.bfloat16)

        x32 = x_ref[0, 0].astype(jnp.float32)       # (Cin, HW)
        h_cur = h_ref[...]                          # (Ch, HW) f32 resident state

        fill_taps(x32, XBASE, Cxp, Cin)
        fill_taps(h_cur, HBASE, Ch, Ch)

        # gates = conv_gates(cat([x, h]))  -- one MXU pass, bias folded in.
        gates = jnp.dot(wg_ref[...], col_ref[...],
                        preferred_element_type=jnp.float32)        # (Gout, HW)

        if cell_type == 'GRU':
            reset = jax.nn.sigmoid(gates[:Ch, :])      # gamma
            update = jax.nn.sigmoid(gates[Ch:, :])     # beta
        else:  # 'MRU'
            reset = jax.nn.sigmoid(gates)
            update = reset

        # candidate = conv_can(cat([x, reset*h])): overwrite ONLY the h-tap
        # region of the same stack (x taps + bias row unchanged).
        fill_taps(reset * h_cur, HBASE, Ch, Ch)

        cnm = jnp.tanh(jnp.dot(wc_ref[...], col_ref[...],
                               preferred_element_type=jnp.float32))  # (Ch, HW)

        h_next = (1.0 - update) * h_cur + update * cnm   # state blend kept f32
        h_ref[...] = h_next
        out_ref[0, 0] = h_next.astype(out_ref.dtype)

    return kernel


def _conv_gru_layer_seq(x_seq, h0, lp, tap_mask, H, W, kernel_size, cell_type):
    """Run one ConvGRU layer over a full (B, T) sequence in a single pallas_call."""
    B, T, Cin, HW = x_seq.shape
    KH, KW = kernel_size
    # The flat-tap / mask math assumes odd kernels, stride 1, kernel < image.
    assert KH % 2 == 1 and KW % 2 == 1 and KH // 2 < H and KW // 2 < W
    assert Cin == lp['Cin'] and HW == H * W
    Ch, Gout, Cxp, Ktot = lp['Ch'], lp['Gout'], lp['Cxp'], lp['Ktot']
    KT = KH * KW

    kernel = _make_layer_kernel(H, W, KH, KW, Cin, Ch, Gout, Cxp, cell_type)

    return pl.pallas_call(
        kernel,
        out_shape=jax.ShapeDtypeStruct((B, T, Ch, HW), jnp.bfloat16),
        grid=(B, T),
        in_specs=[
            pl.BlockSpec((1, 1, Cin, HW), lambda b, t: (b, t, 0, 0)),  # x(t) streamed
            pl.BlockSpec((1, Ch, HW), lambda b, t: (b, 0, 0)),         # h0 (DMA per b only)
            pl.BlockSpec((Gout, Ktot), lambda b, t: (0, 0)),           # packed gate W (resident)
            pl.BlockSpec((Ch, Ktot), lambda b, t: (0, 0)),             # packed cand W (resident)
            pl.BlockSpec((KT, HW), lambda b, t: (0, 0)),               # tap masks (resident)
        ],
        out_specs=pl.BlockSpec((1, 1, Ch, HW), lambda b, t: (b, t, 0, 0)),
        scratch_shapes=[
            pltpu.VMEM((Ch, HW), jnp.float32),       # resident hidden state (f32)
            pltpu.VMEM((Ktot, HW), jnp.bfloat16),    # shared bf16 im2col stack
        ],
        compiler_params=pltpu.CompilerParams(
            dimension_semantics=("parallel", "arbitrary")),
    )(x_seq, h0, lp['wg'], lp['wc'], tap_mask)


def conv_gru_forward(x_seq, packed_layers, tap_mask, kernel_size, cell_type,
                     hidden_state=None):
    """ConvGRU.forward (batch_first=True, use_pose=False, no align / z).
    x_seq: (B, T, C, H, W).  Returns (last-layer output sequence, last hidden
    state), i.e. the return_all_layers=False result."""
    B, T, C, H, W = x_seq.shape
    cur = x_seq.reshape(B, T, C, H * W).astype(jnp.bfloat16)   # bf16 HBM I/O
    h_last = None
    for i, lp in enumerate(packed_layers):
        Ch = lp['Ch']
        if hidden_state is not None and hidden_state[i] is not None:
            h0 = hidden_state[i].reshape(B, Ch, H * W).astype(jnp.bfloat16)
        else:
            h0 = jnp.zeros((B, Ch, H * W), jnp.bfloat16)       # init_hidden: zeros
        cur = _conv_gru_layer_seq(cur, h0, lp, tap_mask, H, W, kernel_size, cell_type)
        h_last = cur[:, -1]
    Ch = packed_layers[-1]['Ch']
    return cur.reshape(B, T, Ch, H, W), h_last.reshape(B, Ch, H, W)


# --------------------------------------------------------------------------
# Pure-JAX f32 reference mirroring the PyTorch module exactly.
# --------------------------------------------------------------------------
def _cell_ref(x, h, p, kernel_size, cell_type):
    KH, KW = kernel_size
    PH, PW = KH // 2, KW // 2
    dn = ('NCHW', 'OIHW', 'NCHW')
    HI = jax.lax.Precision.HIGHEST

    def conv(inp, w, b):
        y = jax.lax.conv_general_dilated(inp, w, (1, 1), ((PH, PH), (PW, PW)),
                                         dimension_numbers=dn, precision=HI)
        return y + b[None, :, None, None]

    Ch = h.shape[1]
    g = conv(jnp.concatenate([x, h], axis=1), p['wg'], p['bg'])
    if cell_type == 'GRU':
        reset = jax.nn.sigmoid(g[:, :Ch])
        update = jax.nn.sigmoid(g[:, Ch:])
    else:
        reset = jax.nn.sigmoid(g)
        update = reset
    cnm = jnp.tanh(conv(jnp.concatenate([x, reset * h], axis=1), p['wc'], p['bc']))
    return (1.0 - update) * h + update * cnm


def conv_gru_ref(x_seq, params_list, hidden_dims, kernel_size, cell_type):
    B, T, _, H, W = x_seq.shape
    cur, last = x_seq, None
    for i, p in enumerate(params_list):
        h = jnp.zeros((B, hidden_dims[i], H, W), jnp.float32)
        outs = []
        for t in range(T):
            h = _cell_ref(cur[:, t], h, p, kernel_size, cell_type)
            outs.append(h)
        cur, last = jnp.stack(outs, axis=1), h
    return cur, last


# --------------------------------------------------------------------------
if __name__ == "__main__":
    B, T, Cin, H, W = 2, 4, 4, 16, 16
    KH, KW = 3, 3
    num_layers = 2
    hidden_dims = [8, 8]
    cell_type = 'GRU'

    key = jax.random.PRNGKey(0)
    params_list = []
    in_dim = Cin
    for i in range(num_layers):
        Ch = hidden_dims[i]
        Gout = Ch + Ch * (cell_type == 'GRU')
        key, k1, k2, k3, k4 = jax.random.split(key, 5)
        fan_in = (in_dim + Ch) * KH * KW
        bound = 1.0 / np.sqrt(fan_in)
        params_list.append(dict(
            wg=jax.random.uniform(k1, (Gout, in_dim + Ch, KH, KW), jnp.float32, -bound, bound),
            bg=jax.random.uniform(k2, (Gout,), jnp.float32, -bound, bound),
            wc=jax.random.uniform(k3, (Ch, in_dim + Ch, KH, KW), jnp.float32, -bound, bound),
            bc=jax.random.uniform(k4, (Ch,), jnp.float32, -bound, bound),
        ))
        in_dim = Ch

    key, kx = jax.random.split(key)
    x_seq = jax.random.normal(kx, (B, T, Cin, H, W), jnp.float32)

    # One-time packing (hoisted out of the forward / time loop).
    tap_mask = make_tap_masks(H, W, KH, KW)
    packed, in_dim = [], Cin
    for i in range(num_layers):
        packed.append(pack_convgru_layer(params_list[i], in_dim, hidden_dims[i], (KH, KW)))
        in_dim = hidden_dims[i]

    out_seq, h_last = conv_gru_forward(x_seq, packed, tap_mask, (KH, KW), cell_type)
    out_seq = jax.block_until_ready(out_seq)
    h_last = jax.block_until_ready(h_last)

    ref_seq, ref_h = conv_gru_ref(x_seq, params_list, hidden_dims, (KH, KW), cell_type)

    # bf16 inputs / weights / inter-layer activations vs. a full-f32 reference;
    # GRU outputs are bounded (|h| < 1), so absolute tolerance is meaningful.
    np.testing.assert_allclose(np.asarray(out_seq.astype(jnp.float32)),
                               np.asarray(ref_seq), rtol=3e-2, atol=3e-2)
    np.testing.assert_allclose(np.asarray(h_last.astype(jnp.float32)),
                               np.asarray(ref_h), rtol=3e-2, atol=3e-2)
    print("KERNEL_OK")
</pallas_src>

<mosaic_0001>
module attributes {stable_mosaic.version = 11 : i64} {
  func.func @kernel(%arg0: i32, %arg1: i32, %arg2: memref<1x1x4x256xbf16, #tpu.memory_space<vmem>>, %arg3: memref<1x8x256xbf16, #tpu.memory_space<vmem>>, %arg4: memref<16x152xbf16, #tpu.memory_space<vmem>>, %arg5: memref<8x152xbf16, #tpu.memory_space<vmem>>, %arg6: memref<9x256xf32, #tpu.memory_space<vmem>>, %arg7: memref<1x1x8x256xbf16, #tpu.memory_space<vmem>>, %arg8: memref<8x256xf32, #tpu.memory_space<vmem>>, %arg9: memref<152x256xbf16, #tpu.memory_space<vmem>>) attributes {dimension_semantics = [#tpu.dimension_semantics<parallel>, #tpu.dimension_semantics<arbitrary>], iteration_bounds = array<i64: 2, 4>, scalar_prefetch = 0 : i64, scratch_operands = 2 : i64, tpu.core_type = #tpu.core_type<tc>, window_params = [{transform_indices = @transform_0, window_bounds = array<i64: 1, 1, 4, 256>}, {transform_indices = @transform_1, window_bounds = array<i64: 1, 8, 256>}, {pipeline_mode = #tpu.pipeline_mode<synchronous>, transform_indices = @transform_2, window_bounds = array<i64: 16, 152>}, {pipeline_mode = #tpu.pipeline_mode<synchronous>, transform_indices = @transform_3, window_bounds = array<i64: 8, 152>}, {pipeline_mode = #tpu.pipeline_mode<synchronous>, transform_indices = @transform_4, window_bounds = array<i64: 9, 256>}, {transform_indices = @transform_5, window_bounds = array<i64: 1, 1, 8, 256>}]} {
    %c0_i32 = arith.constant 0 : i32
    %0 = arith.cmpi eq, %arg1, %c0_i32 : i32
    %1 = arith.extui %0 : i1 to i32
    %c0_i32_0 = arith.constant 0 : i32
    %2 = arith.cmpi ne, %1, %c0_i32_0 : i32
    scf.if %2 {
      %cst_118 = arith.constant 1.000000e+00 : bf16
      %187 = vector.broadcast %cst_118 : bf16 to vector<1x256xbf16>
      %c0_119 = arith.constant 0 : index
      %c0_120 = arith.constant 0 : index
      %188 = vector.load %arg9[%c0_119, %c0_120] : memref<152x256xbf16, #tpu.memory_space<vmem>>, vector<1x256xbf16>
      tpu.vector_store %arg9[%c0_119, %c0_120], %187 {strides = array<i32>} : memref<152x256xbf16, #tpu.memory_space<vmem>>, vector<1x256xbf16>,
      %cst_121 = arith.constant 0.000000e+00 : bf16
      %189 = vector.broadcast %cst_121 : bf16 to vector<7x256xbf16>
      %c1_122 = arith.constant 1 : index
      %c0_123 = arith.constant 0 : index
      %190 = vector.load %arg9[%c1_122, %c0_123] : memref<152x256xbf16, #tpu.memory_space<vmem>>, vector<7x256xbf16>
      tpu.vector_store %arg9[%c1_122, %c0_123], %189 {strides = array<i32>} : memref<152x256xbf16, #tpu.memory_space<vmem>>, vector<7x256xbf16>,
      %cst_124 = arith.constant 0.000000e+00 : bf16
      %191 = vector.broadcast %cst_124 : bf16 to vector<4x256xbf16>
      %c12 = arith.constant 12 : index
      %c0_125 = arith.constant 0 : index
      %192 = vector.load %arg9[%c12, %c0_125] : memref<152x256xbf16, #tpu.memory_space<vmem>>, vector<4x256xbf16>
      tpu.vector_store %arg9[%c12, %c0_125], %191 {strides = array<i32>} : memref<152x256xbf16, #tpu.memory_space<vmem>>, vector<4x256xbf16>,
      %cst_126 = arith.constant 0.000000e+00 : bf16
      %193 = vector.broadcast %cst_126 : bf16 to vector<4x256xbf16>
      %c20 = arith.constant 20 : index
      %c0_127 = arith.constant 0 : index
      %194 = vector.load %arg9[%c20, %c0_127] : memref<152x256xbf16, #tpu.memory_space<vmem>>, vector<4x256xbf16>
      tpu.vector_store %arg9[%c20, %c0_127], %193 {strides = array<i32>} : memref<152x256xbf16, #tpu.memory_space<vmem>>, vector<4x256xbf16>,
      %cst_128 = arith.constant 0.000000e+00 : bf16
      %195 = vector.broadcast %cst_128 : bf16 to vector<4x256xbf16>
      %c28 = arith.constant 28 : index
      %c0_129 = arith.constant 0 : index
      %196 = vector.load %arg9[%c28, %c0_129] : memref<152x256xbf16, #tpu.memory_space<vmem>>, vector<4x256xbf16>
      tpu.vector_store %arg9[%c28, %c0_129], %195 {strides = array<i32>} : memref<152x256xbf16, #tpu.memory_space<vmem>>, vector<4x256xbf16>,
      %cst_130 = arith.constant 0.000000e+00 : bf16
      %197 = vector.broadcast %cst_130 : bf16 to vector<4x256xbf16>
      %c36 = arith.constant 36 : index
      %c0_131 = arith.constant 0 : index
      %198 = vector.load %arg9[%c36, %c0_131] : memref<152x256xbf16, #tpu.memory_space<vmem>>, vector<4x256xbf16>
      tpu.vector_store %arg9[%c36, %c0_131], %197 {strides = array<i32>} : memref<152x256xbf16, #tpu.memory_space<vmem>>, vector<4x256xbf16>,
      %cst_132 = arith.constant 0.000000e+00 : bf16
      %199 = vector.broadcast %cst_132 : bf16 to vector<4x256xbf16>
      %c44 = arith.constant 44 : index
      %c0_133 = arith.constant 0 : index
      %200 = vector.load %arg9[%c44, %c0_133] : memref<152x256xbf16, #tpu.memory_space<vmem>>, vector<4x256xbf16>
      tpu.vector_store %arg9[%c44, %c0_133], %199 {strides = array<i32>} : memref<152x256xbf16, #tpu.memory_space<vmem>>, vector<4x256xbf16>,
      %cst_134 = arith.constant 0.000000e+00 : bf16
      %201 = vector.broadcast %cst_134 : bf16 to vector<4x256xbf16>
      %c52 = arith.constant 52 : index
      %c0_135 = arith.constant 0 : index
      %202 = vector.load %arg9[%c52, %c0_135] : memref<152x256xbf16, #tpu.memory_space<vmem>>, vector<4x256xbf16>
      tpu.vector_store %arg9[%c52, %c0_135], %201 {strides = array<i32>} : memref<152x256xbf16, #tpu.memory_space<vmem>>, vector<4x256xbf16>,
      %cst_136 = arith.constant 0.000000e+00 : bf16
      %203 = vector.broadcast %cst_136 : bf16 to vector<4x256xbf16>
      %c60 = arith.constant 60 : index
      %c0_137 = arith.constant 0 : index
      %204 = vector.load %arg9[%c60, %c0_137] : memref<152x256xbf16, #tpu.memory_space<vmem>>, vector<4x256xbf16>
      tpu.vector_store %arg9[%c60, %c0_137], %203 {strides = array<i32>} : memref<152x256xbf16, #tpu.memory_space<vmem>>, vector<4x256xbf16>,
      %cst_138 = arith.constant 0.000000e+00 : bf16
      %205 = vector.broadcast %cst_138 : bf16 to vector<4x256xbf16>
      %c68 = arith.constant 68 : index
      %c0_139 = arith.constant 0 : index
      %206 = vector.load %arg9[%c68, %c0_139] : memref<152x256xbf16, #tpu.memory_space<vmem>>, vector<4x256xbf16>
      tpu.vector_store %arg9[%c68, %c0_139], %205 {strides = array<i32>} : memref<152x256xbf16, #tpu.memory_space<vmem>>, vector<4x256xbf16>,
      %cst_140 = arith.constant 0.000000e+00 : bf16
      %207 = vector.broadcast %cst_140 : bf16 to vector<4x256xbf16>
      %c76 = arith.constant 76 : index
      %c0_141 = arith.constant 0 : index
      %208 = vector.load %arg9[%c76, %c0_141] : memref<152x256xbf16, #tpu.memory_space<vmem>>, vector<4x256xbf16>
      tpu.vector_store %arg9[%c76, %c0_141], %207 {strides = array<i32>} : memref<152x256xbf16, #tpu.memory_space<vmem>>, vector<4x256xbf16>,
      %c0_142 = arith.constant 0 : index
      %c0_143 = arith.constant 0 : index
      %c0_144 = arith.constant 0 : index
      %209 = vector.load %arg3[%c0_142, %c0_143, %c0_144] : memref<1x8x256xbf16, #tpu.memory_space<vmem>>, vector<1x8x256xbf16>
      %210 = vector.shape_cast %209 : vector<1x8x256xbf16> to vector<8x256xbf16>
      %211 = arith.extf %210 : vector<8x256xbf16> to vector<8x256xf32>
      %c0_145 = arith.constant 0 : index
      %c0_146 = arith.constant 0 : index
      %212 = vector.load %arg8[%c0_145, %c0_146] : memref<8x256xf32, #tpu.memory_space<vmem>>, vector<8x256xf32>
      tpu.vector_store %arg8[%c0_145, %c0_146], %211 {strides = array<i32>} : memref<8x256xf32, #tpu.memory_space<vmem>>, vector<8x256xf32>,
    } else {
    }
    %c0 = arith.constant 0 : index
    %c0_1 = arith.constant 0 : index
    %c0_2 = arith.constant 0 : index
    %c0_3 = arith.constant 0 : index
    %3 = vector.load %arg2[%c0, %c0_1, %c0_2, %c0_3] : memref<1x1x4x256xbf16, #tpu.memory_space<vmem>>, vector<1x1x4x256xbf16>
    %4 = vector.shape_cast %3 : vector<1x1x4x256xbf16> to vector<4x256xbf16>
    %5 = arith.extf %4 : vector<4x256xbf16> to vector<4x256xf32>
    %c0_4 = arith.constant 0 : index
    %c0_5 = arith.constant 0 : index
    %6 = vector.load %arg8[%c0_4, %c0_5] : memref<8x256xf32, #tpu.memory_space<vmem>>, vector<8x256xf32>
    %c17_i32 = arith.constant 17 : i32
    %7 = tpu.dynamic_rotate %5 by %c17_i32 dim 1 : vector<4x256xf32>, i32 -> vector<4x256xf32>
    %c0_6 = arith.constant 0 : index
    %c0_7 = arith.constant 0 : index
    %8 = vector.load %arg6[%c0_6, %c0_7] : memref<9x256xf32, #tpu.memory_space<vmem>>, vector<1x256xf32>
    %9 = vector.broadcast %8 : vector<1x256xf32> to vector<4x256xf32>
    %10 = arith.mulf %7, %9 : vector<4x256xf32>
    %11 = arith.truncf %10 : vector<4x256xf32> to vector<4x256xbf16>
    %c8 = arith.constant 8 : index
    %c0_8 = arith.constant 0 : index
    %12 = vector.load %arg9[%c8, %c0_8] : memref<152x256xbf16, #tpu.memory_space<vmem>>, vector<4x256xbf16>
    tpu.vector_store %arg9[%c8, %c0_8], %11 {strides = array<i32>} : memref<152x256xbf16, #tpu.memory_space<vmem>>, vector<4x256xbf16>,
    %c16_i32 = arith.constant 16 : i32
    %13 = tpu.dynamic_rotate %5 by %c16_i32 dim 1 : vector<4x256xf32>, i32 -> vector<4x256xf32>
    %c1 = arith.constant 1 : index
    %c0_9 = arith.constant 0 : index
    %14 = vector.load %arg6[%c1, %c0_9] : memref<9x256xf32, #tpu.memory_space<vmem>>, vector<1x256xf32>
    %15 = vector.broadcast %14 : vector<1x256xf32> to vector<4x256xf32>
    %16 = arith.mulf %13, %15 : vector<4x256xf32>
    %17 = arith.truncf %16 : vector<4x256xf32> to vector<4x256xbf16>
    %c16 = arith.constant 16 : index
    %c0_10 = arith.constant 0 : index
    %18 = vector.load %arg9[%c16, %c0_10] : memref<152x256xbf16, #tpu.memory_space<vmem>>, vector<4x256xbf16>
    tpu.vector_store %arg9[%c16, %c0_10], %17 {strides = array<i32>} : memref<152x256xbf16, #tpu.memory_space<vmem>>, vector<4x256xbf16>,
    %c15_i32 = arith.constant 15 : i32
    %19 = tpu.dynamic_rotate %5 by %c15_i32 dim 1 : vector<4x256xf32>, i32 -> vector<4x256xf32>
    %c2 = arith.constant 2 : index
    %c0_11 = arith.constant 0 : index
    %20 = vector.load %arg6[%c2, %c0_11] : memref<9x256xf32, #tpu.memory_space<vmem>>, vector<1x256xf32>
    %21 = vector.broadcast %20 : vector<1x256xf32> to vector<4x256xf32>
    %22 = arith.mulf %19, %21 : vector<4x256xf32>
    %23 = arith.truncf %22 : vector<4x256xf32> to vector<4x256xbf16>
    %c24 = arith.constant 24 : index
    %c0_12 = arith.constant 0 : index
    %24 = vector.load %arg9[%c24, %c0_12] : memref<152x256xbf16, #tpu.memory_space<vmem>>, vector<4x256xbf16>
    tpu.vector_store %arg9[%c24, %c0_12], %23 {strides = array<i32>} : memref<152x256xbf16, #tpu.memory_space<vmem>>, vector<4x256xbf16>,
    %c1_i32 = arith.constant 1 : i32
    %25 = tpu.dynamic_rotate %5 by %c1_i32 dim 1 : vector<4x256xf32>, i32 -> vector<4x256xf32>
    %c3 = arith.constant 3 : index
    %c0_13 = arith.constant 0 : index
    %26 = vector.load %arg6[%c3, %c0_13] : memref<9x256xf32, #tpu.memory_space<vmem>>, vector<1x256xf32>
    %27 = vector.broadcast %26 : vector<1x256xf32> to vector<4x256xf32>
    %28 = arith.mulf %25, %27 : vector<4x256xf32>
    %29 = arith.truncf %28 : vector<4x256xf32> to vector<4x256xbf16>
    %c32 = arith.constant 32 : index
    %c0_14 = arith.constant 0 : index
    %30 = vector.load %arg9[%c32, %c0_14] : memref<152x256xbf16, #tpu.memory_space<vmem>>, vector<4x256xbf16>
    tpu.vector_store %arg9[%c32, %c0_14], %29 {strides = array<i32>} : memref<152x256xbf16, #tpu.memory_space<vmem>>, vector<4x256xbf16>,
    %31 = arith.truncf %5 : vector<4x256xf32> to vector<4x256xbf16>
    %c40 = arith.constant 40 : index
    %c0_15 = arith.constant 0 : index
    %32 = vector.load %arg9[%c40, %c0_15] : memref<152x256xbf16, #tpu.memory_space<vmem>>, vector<4x256xbf16>
    tpu.vector_store %arg9[%c40, %c0_15], %31 {strides = array<i32>} : memref<152x256xbf16, #tpu.memory_space<vmem>>, vector<4x256xbf16>,
    %c255_i32 = arith.constant 255 : i32
    %33 = tpu.dynamic_rotate %5 by %c255_i32 dim 1 : vector<4x256xf32>, i32 -> vector<4x256xf32>
    %c5 = arith.constant 5 : index
    %c0_16 = arith.constant 0 : index
    %34 = vector.load %arg6[%c5, %c0_16] : memref<9x256xf32, #tpu.memory_space<vmem>>, vector<1x256xf32>
    %35 = vector.broadcast %34 : vector<1x256xf32> to vector<4x256xf32>
    %36 = arith.mulf %33, %35 : vector<4x256xf32>
    %37 = arith.truncf %36 : vector<4x256xf32> to vector<4x256xbf16>
    %c48 = arith.constant 48 : index
    %c0_17 = arith.constant 0 : index
    %38 = vector.load %arg9[%c48, %c0_17] : memref<152x256xbf16, #tpu.memory_space<vmem>>, vector<4x256xbf16>
    tpu.vector_store %arg9[%c48, %c0_17], %37 {strides = array<i32>} : memref<152x256xbf16, #tpu.memory_space<vmem>>, vector<4x256xbf16>,
    %c241_i32 = arith.constant 241 : i32
    %39 = tpu.dynamic_rotate %5 by %c241_i32 dim 1 : vector<4x256xf32>, i32 -> vector<4x256xf32>
    %c6 = arith.constant 6 : index
    %c0_18 = arith.constant 0 : index
    %40 = vector.load %arg6[%c6, %c0_18] : memref<9x256xf32, #tpu.memory_space<vmem>>, vector<1x256xf32>
    %41 = vector.broadcast %40 : vector<1x256xf32> to vector<4x256xf32>
    %42 = arith.mulf %39, %41 : vector<4x256xf32>
    %43 = arith.truncf %42 : vector<4x256xf32> to vector<4x256xbf16>
    %c56 = arith.constant 56 : index
    %c0_19 = arith.constant 0 : index
    %44 = vector.load %arg9[%c56, %c0_19] : memref<152x256xbf16, #tpu.memory_space<vmem>>, vector<4x256xbf16>
    tpu.vector_store %arg9[%c56, %c0_19], %43 {strides = array<i32>} : memref<152x256xbf16, #tpu.memory_space<vmem>>, vector<4x256xbf16>,
    %c240_i32 = arith.constant 240 : i32
    %45 = tpu.dynamic_rotate %5 by %c240_i32 dim 1 : vector<4x256xf32>, i32 -> vector<4x256xf32>
    %c7 = arith.constant 7 : index
    %c0_20 = arith.constant 0 : index
    %46 = vector.load %arg6[%c7, %c0_20] : memref<9x256xf32, #tpu.memory_space<vmem>>, vector<1x256xf32>
    %47 = vector.broadcast %46 : vector<1x256xf32> to vector<4x256xf32>
    %48 = arith.mulf %45, %47 : vector<4x256xf32>
    %49 = arith.truncf %48 : vector<4x256xf32> to vector<4x256xbf16>
    %c64 = arith.constant 64 : index
    %c0_21 = arith.constant 0 : index
    %50 = vector.load %arg9[%c64, %c0_21] : memref<152x256xbf16, #tpu.memory_space<vmem>>, vector<4x256xbf16>
    tpu.vector_store %arg9[%c64, %c0_21], %49 {strides = array<i32>} : memref<152x256xbf16, #tpu.memory_space<vmem>>, vector<4x256xbf16>,
    %c239_i32 = arith.constant 239 : i32
    %51 = tpu.dynamic_rotate %5 by %c239_i32 dim 1 : vector<4x256xf32>, i32 -> vector<4x256xf32>
    %c8_22 = arith.constant 8 : index
    %c0_23 = arith.constant 0 : index
    %52 = vector.load %arg6[%c8_22, %c0_23] : memref<9x256xf32, #tpu.memory_space<vmem>>, vector<1x256xf32>
    %53 = vector.broadcast %52 : vector<1x256xf32> to vector<4x256xf32>
    %54 = arith.mulf %51, %53 : vector<4x256xf32>
    %55 = arith.truncf %54 : vector<4x256xf32> to vector<4x256xbf16>
    %c72 = arith.constant 72 : index
    %c0_24 = arith.constant 0 : index
    %56 = vector.load %arg9[%c72, %c0_24] : memref<152x256xbf16, #tpu.memory_space<vmem>>, vector<4x256xbf16>
    tpu.vector_store %arg9[%c72, %c0_24], %55 {strides = array<i32>} : memref<152x256xbf16, #tpu.memory_space<vmem>>, vector<4x256xbf16>,
    %c17_i32_25 = arith.constant 17 : i32
    %57 = tpu.dynamic_rotate %6 by %c17_i32_25 dim 1 : vector<8x256xf32>, i32 -> vector<8x256xf32>
    %c0_26 = arith.constant 0 : index
    %c0_27 = arith.constant 0 : index
    %58 = vector.load %arg6[%c0_26, %c0_27] : memref<9x256xf32, #tpu.memory_space<vmem>>, vector<1x256xf32>
    %59 = vector.broadcast %58 : vector<1x256xf32> to vector<8x256xf32>
    %60 = arith.mulf %57, %59 : vector<8x256xf32>
    %61 = arith.truncf %60 : vector<8x256xf32> to vector<8x256xbf16>
    %c80 = arith.constant 80 : index
    %c0_28 = arith.constant 0 : index
    %62 = vector.load %arg9[%c80, %c0_28] : memref<152x256xbf16, #tpu.memory_space<vmem>>, vector<8x256xbf16>
    tpu.vector_store %arg9[%c80, %c0_28], %61 {strides = array<i32>} : memref<152x256xbf16, #tpu.memory_space<vmem>>, vector<8x256xbf16>,
    %c16_i32_29 = arith.constant 16 : i32
    %63 = tpu.dynamic_rotate %6 by %c16_i32_29 dim 1 : vector<8x256xf32>, i32 -> vector<8x256xf32>
    %c1_30 = arith.constant 1 : index
    %c0_31 = arith.constant 0 : index
    %64 = vector.load %arg6[%c1_30, %c0_31] : memref<9x256xf32, #tpu.memory_space<vmem>>, vector<1x256xf32>
    %65 = vector.broadcast %64 : vector<1x256xf32> to vector<8x256xf32>
    %66 = arith.mulf %63, %65 : vector<8x256xf32>
    %67 = arith.truncf %66 : vector<8x256xf32> to vector<8x256xbf16>
    %c88 = arith.constant 88 : index
    %c0_32 = arith.constant 0 : index
    %68 = vector.load %arg9[%c88, %c0_32] : memref<152x256xbf16, #tpu.memory_space<vmem>>, vector<8x256xbf16>
    tpu.vector_store %arg9[%c88, %c0_32], %67 {strides = array<i32>} : memref<152x256xbf16, #tpu.memory_space<vmem>>, vector<8x256xbf16>,
    %c15_i32_33 = arith.constant 15 : i32
    %69 = tpu.dynamic_rotate %6 by %c15_i32_33 dim 1 : vector<8x256xf32>, i32 -> vector<8x256xf32>
    %c2_34 = arith.constant 2 : index
    %c0_35 = arith.constant 0 : index
    %70 = vector.load %arg6[%c2_34, %c0_35] : memref<9x256xf32, #tpu.memory_space<vmem>>, vector<1x256xf32>
    %71 = vector.broadcast %70 : vector<1x256xf32> to vector<8x256xf32>
    %72 = arith.mulf %69, %71 : vector<8x256xf32>
    %73 = arith.truncf %72 : vector<8x256xf32> to vector<8x256xbf16>
    %c96 = arith.constant 96 : index
    %c0_36 = arith.constant 0 : index
    %74 = vector.load %arg9[%c96, %c0_36] : memref<152x256xbf16, #tpu.memory_space<vmem>>, vector<8x256xbf16>
    tpu.vector_store %arg9[%c96, %c0_36], %73 {strides = array<i32>} : memref<152x256xbf16, #tpu.memory_space<vmem>>, vector<8x256xbf16>,
    %c1_i32_37 = arith.constant 1 : i32
    %75 = tpu.dynamic_rotate %6 by %c1_i32_37 dim 1 : vector<8x256xf32>, i32 -> vector<8x256xf32>
    %c3_38 = arith.constant 3 : index
    %c0_39 = arith.constant 0 : index
    %76 = vector.load %arg6[%c3_38, %c0_39] : memref<9x256xf32, #tpu.memory_space<vmem>>, vector<1x256xf32>
    %77 = vector.broadcast %76 : vector<1x256xf32> to vector<8x256xf32>
    %78 = arith.mulf %75, %77 : vector<8x256xf32>
    %79 = arith.truncf %78 : vector<8x256xf32> to vector<8x256xbf16>
    %c104 = arith.constant 104 : index
    %c0_40 = arith.constant 0 : index
    %80 = vector.load %arg9[%c104, %c0_40] : memref<152x256xbf16, #tpu.memory_space<vmem>>, vector<8x256xbf16>
    tpu.vector_store %arg9[%c104, %c0_40], %79 {strides = array<i32>} : memref<152x256xbf16, #tpu.memory_space<vmem>>, vector<8x256xbf16>,
    %81 = arith.truncf %6 : vector<8x256xf32> to vector<8x256xbf16>
    %c112 = arith.constant 112 : index
    %c0_41 = arith.constant 0 : index
    %82 = vector.load %arg9[%c112, %c0_41] : memref<152x256xbf16, #tpu.memory_space<vmem>>, vector<8x256xbf16>
    tpu.vector_store %arg9[%c112, %c0_41], %81 {strides = array<i32>} : memref<152x256xbf16, #tpu.memory_space<vmem>>, vector<8x256xbf16>,
    %c255_i32_42 = arith.constant 255 : i32
    %83 = tpu.dynamic_rotate %6 by %c255_i32_42 dim 1 : vector<8x256xf32>, i32 -> vector<8x256xf32>
    %c5_43 = arith.constant 5 : index
    %c0_44 = arith.constant 0 : index
    %84 = vector.load %arg6[%c5_43, %c0_44] : memref<9x256xf32, #tpu.memory_space<vmem>>, vector<1x256xf32>
    %85 = vector.broadcast %84 : vector<1x256xf32> to vector<8x256xf32>
    %86 = arith.mulf %83, %85 : vector<8x256xf32>
    %87 = arith.truncf %86 : vector<8x256xf32> to vector<8x256xbf16>
    %c120 = arith.constant 120 : index
    %c0_45 = arith.constant 0 : index
    %88 = vector.load %arg9[%c120, %c0_45] : memref<152x256xbf16, #tpu.memory_space<vmem>>, vector<8x256xbf16>
    tpu.vector_store %arg9[%c120, %c0_45], %87 {strides = array<i32>} : memref<152x256xbf16, #tpu.memory_space<vmem>>, vector<8x256xbf16>,
    %c241_i32_46 = arith.constant 241 : i32
    %89 = tpu.dynamic_rotate %6 by %c241_i32_46 dim 1 : vector<8x256xf32>, i32 -> vector<8x256xf32>
    %c6_47 = arith.constant 6 : index
    %c0_48 = arith.constant 0 : index
    %90 = vector.load %arg6[%c6_47, %c0_48] : memref<9x256xf32, #tpu.memory_space<vmem>>, vector<1x256xf32>
    %91 = vector.broadcast %90 : vector<1x256xf32> to vector<8x256xf32>
    %92 = arith.mulf %89, %91 : vector<8x256xf32>
    %93 = arith.truncf %92 : vector<8x256xf32> to vector<8x256xbf16>
    %c128 = arith.constant 128 : index
    %c0_49 = arith.constant 0 : index
    %94 = vector.load %arg9[%c128, %c0_49] : memref<152x256xbf16, #tpu.memory_space<vmem>>, vector<8x256xbf16>
    tpu.vector_store %arg9[%c128, %c0_49], %93 {strides = array<i32>} : memref<152x256xbf16, #tpu.memory_space<vmem>>, vector<8x256xbf16>,
    %c240_i32_50 = arith.constant 240 : i32
    %95 = tpu.dynamic_rotate %6 by %c240_i32_50 dim 1 : vector<8x256xf32>, i32 -> vector<8x256xf32>
    %c7_51 = arith.constant 7 : index
    %c0_52 = arith.constant 0 : index
    %96 = vector.load %arg6[%c7_51, %c0_52] : memref<9x256xf32, #tpu.memory_space<vmem>>, vector<1x256xf32>
    %97 = vector.broadcast %96 : vector<1x256xf32> to vector<8x256xf32>
    %98 = arith.mulf %95, %97 : vector<8x256xf32>
    %99 = arith.truncf %98 : vector<8x256xf32> to vector<8x256xbf16>
    %c136 = arith.constant 136 : index
    %c0_53 = arith.constant 0 : index
    %100 = vector.load %arg9[%c136, %c0_53] : memref<152x256xbf16, #tpu.memory_space<vmem>>, vector<8x256xbf16>
    tpu.vector_store %arg9[%c136, %c0_53], %99 {strides = array<i32>} : memref<152x256xbf16, #tpu.memory_space<vmem>>, vector<8x256xbf16>,
    %c239_i32_54 = arith.constant 239 : i32
    %101 = tpu.dynamic_rotate %6 by %c239_i32_54 dim 1 : vector<8x256xf32>, i32 -> vector<8x256xf32>
    %c8_55 = arith.constant 8 : index
    %c0_56 = arith.constant 0 : index
    %102 = vector.load %arg6[%c8_55, %c0_56] : memref<9x256xf32, #tpu.memory_space<vmem>>, vector<1x256xf32>
    %103 = vector.broadcast %102 : vector<1x256xf32> to vector<8x256xf32>
    %104 = arith.mulf %101, %103 : vector<8x256xf32>
    %105 = arith.truncf %104 : vector<8x256xf32> to vector<8x256xbf16>
    %c144 = arith.constant 144 : index
    %c0_57 = arith.constant 0 : index
    %106 = vector.load %arg9[%c144, %c0_57] : memref<152x256xbf16, #tpu.memory_space<vmem>>, vector<8x256xbf16>
    tpu.vector_store %arg9[%c144, %c0_57], %105 {strides = array<i32>} : memref<152x256xbf16, #tpu.memory_space<vmem>>, vector<8x256xbf16>,
    %c0_58 = arith.constant 0 : index
    %c0_59 = arith.constant 0 : index
    %107 = vector.load %arg4[%c0_58, %c0_59] : memref<16x152xbf16, #tpu.memory_space<vmem>>, vector<16x152xbf16>
    %c0_60 = arith.constant 0 : index
    %c0_61 = arith.constant 0 : index
    %108 = vector.load %arg9[%c0_60, %c0_61] : memref<152x256xbf16, #tpu.memory_space<vmem>>, vector<152x256xbf16>
    %cst = arith.constant dense<0.000000e+00> : vector<16x256xf32>
    %109 = tpu.matmul %107, %108, %cst {dimension_numbers = #tpu.dot_dimension_numbers<[1], [0], [0], [1], [0, 0, 1, 1], [], []>} : vector<16x152xbf16>, vector<152x256xbf16>, vector<16x256xf32> -> vector<16x256xf32>
    %110 = vector.extract_strided_slice %109 {offsets = [0, 0], sizes = [8, 256], strides = [1, 1]} : vector<16x256xf32> to vector<8x256xf32>
    %111 = arith.negf %110 : vector<8x256xf32>
    %112 = math.exp %111 : vector<8x256xf32>
    %cst_62 = arith.constant 1.000000e+00 : f32
    %113 = vector.broadcast %cst_62 : f32 to vector<8x256xf32>
    %114 = arith.addf %113, %112 : vector<8x256xf32>
    %115 = arith.divf %113, %114 : vector<8x256xf32>
    %116 = vector.extract_strided_slice %109 {offsets = [8, 0], sizes = [8, 256], strides = [1, 1]} : vector<16x256xf32> to vector<8x256xf32>
    %117 = arith.negf %116 : vector<8x256xf32>
    %118 = math.exp %117 : vector<8x256xf32>
    %cst_63 = arith.constant 1.000000e+00 : f32
    %119 = vector.broadcast %cst_63 : f32 to vector<8x256xf32>
    %120 = arith.addf %119, %118 : vector<8x256xf32>
    %121 = arith.divf %119, %120 : vector<8x256xf32>
    %122 = arith.mulf %115, %6 : vector<8x256xf32>
    %c17_i32_64 = arith.constant 17 : i32
    %123 = tpu.dynamic_rotate %122 by %c17_i32_64 dim 1 : vector<8x256xf32>, i32 -> vector<8x256xf32>
    %c0_65 = arith.constant 0 : index
    %c0_66 = arith.constant 0 : index
    %124 = vector.load %arg6[%c0_65, %c0_66] : memref<9x256xf32, #tpu.memory_space<vmem>>, vector<1x256xf32>
    %125 = vector.broadcast %124 : vector<1x256xf32> to vector<8x256xf32>
    %126 = arith.mulf %123, %125 : vector<8x256xf32>
    %127 = arith.truncf %126 : vector<8x256xf32> to vector<8x256xbf16>
    %c80_67 = arith.constant 80 : index
    %c0_68 = arith.constant 0 : index
    %128 = vector.load %arg9[%c80_67, %c0_68] : memref<152x256xbf16, #tpu.memory_space<vmem>>, vector<8x256xbf16>
    tpu.vector_store %arg9[%c80_67, %c0_68], %127 {strides = array<i32>} : memref<152x256xbf16, #tpu.memory_space<vmem>>, vector<8x256xbf16>,
    %c16_i32_69 = arith.constant 16 : i32
    %129 = tpu.dynamic_rotate %122 by %c16_i32_69 dim 1 : vector<8x256xf32>, i32 -> vector<8x256xf32>
    %c1_70 = arith.constant 1 : index
    %c0_71 = arith.constant 0 : index
    %130 = vector.load %arg6[%c1_70, %c0_71] : memref<9x256xf32, #tpu.memory_space<vmem>>, vector<1x256xf32>
    %131 = vector.broadcast %130 : vector<1x256xf32> to vector<8x256xf32>
    %132 = arith.mulf %129, %131 : vector<8x256xf32>
    %133 = arith.truncf %132 : vector<8x256xf32> to vector<8x256xbf16>
    %c88_72 = arith.constant 88 : index
    %c0_73 = arith.constant 0 : index
    %134 = vector.load %arg9[%c88_72, %c0_73] : memref<152x256xbf16, #tpu.memory_space<vmem>>, vector<8x256xbf16>
    tpu.vector_store %arg9[%c88_72, %c0_73], %133 {strides = array<i32>} : memref<152x256xbf16, #tpu.memory_space<vmem>>, vector<8x256xbf16>,
    %c15_i32_74 = arith.constant 15 : i32
    %135 = tpu.dynamic_rotate %122 by %c15_i32_74 dim 1 : vector<8x256xf32>, i32 -> vector<8x256xf32>
    %c2_75 = arith.constant 2 : index
    %c0_76 = arith.constant 0 : index
    %136 = vector.load %arg6[%c2_75, %c0_76] : memref<9x256xf32, #tpu.memory_space<vmem>>, vector<1x256xf32>
    %137 = vector.broadcast %136 : vector<1x256xf32> to vector<8x256xf32>
    %138 = arith.mulf %135, %137 : vector<8x256xf32>
    %139 = arith.truncf %138 : vector<8x256xf32> to vector<8x256xbf16>
    %c96_77 = arith.constant 96 : index
    %c0_78 = arith.constant 0 : index
    %140 = vector.load %arg9[%c96_77, %c0_78] : memref<152x256xbf16, #tpu.memory_space<vmem>>, vector<8x256xbf16>
    tpu.vector_store %arg9[%c96_77, %c0_78], %139 {strides = array<i32>} : memref<152x256xbf16, #tpu.memory_space<vmem>>, vector<8x256xbf16>,
    %c1_i32_79 = arith.constant 1 : i32
    %141 = tpu.dynamic_rotate %122 by %c1_i32_79 dim 1 : vector<8x256xf32>, i32 -> vector<8x256xf32>
    %c3_80 = arith.constant 3 : index
    %c0_81 = arith.constant 0 : index
    %142 = vector.load %arg6[%c3_80, %c0_81] : memref<9x256xf32, #tpu.memory_space<vmem>>, vector<1x256xf32>
    %143 = vector.broadcast %142 : vector<1x256xf32> to vector<8x256xf32>
    %144 = arith.mulf %141, %143 : vector<8x256xf32>
    %145 = arith.truncf %144 : vector<8x256xf32> to vector<8x256xbf16>
    %c104_82 = arith.constant 104 : index
    %c0_83 = arith.constant 0 : index
    %146 = vector.load %arg9[%c104_82, %c0_83] : memref<152x256xbf16, #tpu.memory_space<vmem>>, vector<8x256xbf16>
    tpu.vector_store %arg9[%c104_82, %c0_83], %145 {strides = array<i32>} : memref<152x256xbf16, #tpu.memory_space<vmem>>, vector<8x256xbf16>,
    %147 = arith.truncf %122 : vector<8x256xf32> to vector<8x256xbf16>
    %c112_84 = arith.constant 112 : index
    %c0_85 = arith.constant 0 : index
    %148 = vector.load %arg9[%c112_84, %c0_85] : memref<152x256xbf16, #tpu.memory_space<vmem>>, vector<8x256xbf16>
    tpu.vector_store %arg9[%c112_84, %c0_85], %147 {strides = array<i32>} : memref<152x256xbf16, #tpu.memory_space<vmem>>, vector<8x256xbf16>,
    %c255_i32_86 = arith.constant 255 : i32
    %149 = tpu.dynamic_rotate %122 by %c255_i32_86 dim 1 : vector<8x256xf32>, i32 -> vector<8x256xf32>
    %c5_87 = arith.constant 5 : index
    %c0_88 = arith.constant 0 : index
    %150 = vector.load %arg6[%c5_87, %c0_88] : memref<9x256xf32, #tpu.memory_space<vmem>>, vector<1x256xf32>
    %151 = vector.broadcast %150 : vector<1x256xf32> to vector<8x256xf32>
    %152 = arith.mulf %149, %151 : vector<8x256xf32>
    %153 = arith.truncf %152 : vector<8x256xf32> to vector<8x256xbf16>
    %c120_89 = arith.constant 120 : index
    %c0_90 = arith.constant 0 : index
    %154 = vector.load %arg9[%c120_89, %c0_90] : memref<152x256xbf16, #tpu.memory_space<vmem>>, vector<8x256xbf16>
    tpu.vector_store %arg9[%c120_89, %c0_90], %153 {strides = array<i32>} : memref<152x256xbf16, #tpu.memory_space<vmem>>, vector<8x256xbf16>,
    %c241_i32_91 = arith.constant 241 : i32
    %155 = tpu.dynamic_rotate %122 by %c241_i32_91 dim 1 : vector<8x256xf32>, i32 -> vector<8x256xf32>
    %c6_92 = arith.constant 6 : index
    %c0_93 = arith.constant 0 : index
    %156 = vector.load %arg6[%c6_92, %c0_93] : memref<9x256xf32, #tpu.memory_space<vmem>>, vector<1x256xf32>
    %157 = vector.broadcast %156 : vector<1x256xf32> to vector<8x256xf32>
    %158 = arith.mulf %155, %157 : vector<8x256xf32>
    %159 = arith.truncf %158 : vector<8x256xf32> to vector<8x256xbf16>
    %c128_94 = arith.constant 128 : index
    %c0_95 = arith.constant 0 : index
    %160 = vector.load %arg9[%c128_94, %c0_95] : memref<152x256xbf16, #tpu.memory_space<vmem>>, vector<8x256xbf16>
    tpu.vector_store %arg9[%c128_94, %c0_95], %159 {strides = array<i32>} : memref<152x256xbf16, #tpu.memory_space<vmem>>, vector<8x256xbf16>,
    %c240_i32_96 = arith.constant 240 : i32
    %161 = tpu.dynamic_rotate %122 by %c240_i32_96 dim 1 : vector<8x256xf32>, i32 -> vector<8x256xf32>
    %c7_97 = arith.constant 7 : index
    %c0_98 = arith.constant 0 : index
    %162 = vector.load %arg6[%c7_97, %c0_98] : memref<9x256xf32, #tpu.memory_space<vmem>>, vector<1x256xf32>
    %163 = vector.broadcast %162 : vector<1x256xf32> to vector<8x256xf32>
    %164 = arith.mulf %161, %163 : vector<8x256xf32>
    %165 = arith.truncf %164 : vector<8x256xf32> to vector<8x256xbf16>
    %c136_99 = arith.constant 136 : index
    %c0_100 = arith.constant 0 : index
    %166 = vector.load %arg9[%c136_99, %c0_100] : memref<152x256xbf16, #tpu.memory_space<vmem>>, vector<8x256xbf16>
    tpu.vector_store %arg9[%c136_99, %c0_100], %165 {strides = array<i32>} : memref<152x256xbf16, #tpu.memory_space<vmem>>, vector<8x256xbf16>,
    %c239_i32_101 = arith.constant 239 : i32
    %167 = tpu.dynamic_rotate %122 by %c239_i32_101 dim 1 : vector<8x256xf32>, i32 -> vector<8x256xf32>
    %c8_102 = arith.constant 8 : index
    %c0_103 = arith.constant 0 : index
    %168 = vector.load %arg6[%c8_102, %c0_103] : memref<9x256xf32, #tpu.memory_space<vmem>>, vector<1x256xf32>
    %169 = vector.broadcast %168 : vector<1x256xf32> to vector<8x256xf32>
    %170 = arith.mulf %167, %169 : vector<8x256xf32>
    %171 = arith.truncf %170 : vector<8x256xf32> to vector<8x256xbf16>
    %c144_104 = arith.constant 144 : index
    %c0_105 = arith.constant 0 : index
    %172 = vector.load %arg9[%c144_104, %c0_105] : memref<152x256xbf16, #tpu.memory_space<vmem>>, vector<8x256xbf16>
    tpu.vector_store %arg9[%c144_104, %c0_105], %171 {strides = array<i32>} : memref<152x256xbf16, #tpu.memory_space<vmem>>, vector<8x256xbf16>,
    %c0_106 = arith.constant 0 : index
    %c0_107 = arith.constant 0 : index
    %173 = vector.load %arg5[%c0_106, %c0_107] : memref<8x152xbf16, #tpu.memory_space<vmem>>, vector<8x152xbf16>
    %c0_108 = arith.constant 0 : index
    %c0_109 = arith.constant 0 : index
    %174 = vector.load %arg9[%c0_108, %c0_109] : memref<152x256xbf16, #tpu.memory_space<vmem>>, vector<152x256xbf16>
    %cst_110 = arith.constant dense<0.000000e+00> : vector<8x256xf32>
    %175 = tpu.matmul %173, %174, %cst_110 {dimension_numbers = #tpu.dot_dimension_numbers<[1], [0], [0], [1], [0, 0, 1, 1], [], []>} : vector<8x152xbf16>, vector<152x256xbf16>, vector<8x256xf32> -> vector<8x256xf32>
    %176 = math.tanh %175 : vector<8x256xf32>
    %cst_111 = arith.constant 1.000000e+00 : f32
    %177 = vector.broadcast %cst_111 : f32 to vector<8x256xf32>
    %178 = arith.subf %177, %121 : vector<8x256xf32>
    %179 = arith.mulf %178, %6 : vector<8x256xf32>
    %180 = arith.mulf %121, %176 : vector<8x256xf32>
    %181 = arith.addf %179, %180 : vector<8x256xf32>
    %c0_112 = arith.constant 0 : index
    %c0_113 = arith.constant 0 : index
    %182 = vector.load %arg8[%c0_112, %c0_113] : memref<8x256xf32, #tpu.memory_space<vmem>>, vector<8x256xf32>
    tpu.vector_store %arg8[%c0_112, %c0_113], %181 {strides = array<i32>} : memref<8x256xf32, #tpu.memory_space<vmem>>, vector<8x256xf32>,
    %183 = arith.truncf %181 : vector<8x256xf32> to vector<8x256xbf16>
    %c0_114 = arith.constant 0 : index
    %c0_115 = arith.constant 0 : index
    %c0_116 = arith.constant 0 : index
    %c0_117 = arith.constant 0 : index
    %184 = vector.load %arg7[%c0_114, %c0_115, %c0_116, %c0_117] : memref<1x1x8x256xbf16, #tpu.memory_space<vmem>>, vector<1x1x8x256xbf16>
    %185 = vector.shape_cast %184 : vector<1x1x8x256xbf16> to vector<8x256xbf16>
    %186 = vector.shape_cast %183 : vector<8x256xbf16> to vector<1x1x8x256xbf16>
    tpu.vector_store %arg7[%c0_114, %c0_115, %c0_116, %c0_117], %186 {strides = array<i32>} : memref<1x1x8x256xbf16, #tpu.memory_space<vmem>>, vector<1x1x8x256xbf16>,
    return
  }
  func.func @transform_0(%arg0: i32, %arg1: i32) -> (i32, i32, i32, i32) {
    %c0_i32 = arith.constant 0 : i32
    %c0_i32_0 = arith.constant 0 : i32
    %c0_i32_1 = arith.constant 0 : i32
    return %arg0, %arg1, %c0_i32, %c0_i32_0 : i32, i32, i32, i32
  }
  func.func @transform_1(%arg0: i32, %arg1: i32) -> (i32, i32, i32) {
    %c0_i32 = arith.constant 0 : i32
    %c0_i32_0 = arith.constant 0 : i32
    %c0_i32_1 = arith.constant 0 : i32
    return %arg0, %c0_i32, %c0_i32_0 : i32, i32, i32
  }
  func.func @transform_2(%arg0: i32, %arg1: i32) -> (i32, i32) {
    %c0_i32 = arith.constant 0 : i32
    %c0_i32_0 = arith.constant 0 : i32
    %c0_i32_1 = arith.constant 0 : i32
    return %c0_i32, %c0_i32_0 : i32, i32
  }
  func.func @transform_3(%arg0: i32, %arg1: i32) -> (i32, i32) {
    %c0_i32 = arith.constant 0 : i32
    %c0_i32_0 = arith.constant 0 : i32
    %c0_i32_1 = arith.constant 0 : i32
    return %c0_i32, %c0_i32_0 : i32, i32
  }
  func.func @transform_4(%arg0: i32, %arg1: i32) -> (i32, i32) {
    %c0_i32 = arith.constant 0 : i32
    %c0_i32_0 = arith.constant 0 : i32
    %c0_i32_1 = arith.constant 0 : i32
    return %c0_i32, %c0_i32_0 : i32, i32
  }
  func.func @transform_5(%arg0: i32, %arg1: i32) -> (i32, i32, i32, i32) {
    %c0_i32 = arith.constant 0 : i32
    %c0_i32_0 = arith.constant 0 : i32
    %c0_i32_1 = arith.constant 0 : i32
    return %arg0, %arg1, %c0_i32, %c0_i32_0 : i32, i32, i32, i32
  }
}

</mosaic_0001>

<llo_original>
// kernel: tpu_custom_call.1
$region0: #{tpu_custom_call.1}
  #allocation0 [shape = 'u32[]', space=smem, size = 0x4, offset = 0x4, fixed_abs, tag = 'smem constant byte address 0x4 - core index']
  #allocation1 [shape = 'u32[144,128]{1,0:T(1,128)}', space=vmem, size = 0x12000, scoped, tag = 'internal scratch']
  #allocation2 [shape = 'f32[8,256]{1,0:T(8,128)}', space=vmem, size = 0x2000, scoped, tag = 'scratch operand']
  #allocation3 [shape = 'bf16[152,256]{1,0:T(8,128)(2,1)}', space=vmem, size = 0x13000, scoped, tag = 'scratch operand']
  %s0 = inlined_call_operand.hbm [shape: bf16[2,4,4,256], index: 0, kind: input, shape index: {}]
  %s1 = inlined_call_operand.hbm [shape: bf16[2,8,256], index: 1, kind: input, shape index: {}]
  %s2 = inlined_call_operand.hbm [shape: bf16[16,152], index: 2, kind: input, shape index: {}]
  %s3 = inlined_call_operand.hbm [shape: bf16[8,152], index: 3, kind: input, shape index: {}]
  %s4 = inlined_call_operand.hbm [shape: f32[9,256], index: 4, kind: input, shape index: {}]
  %s5 = inlined_call_operand.hbm [shape: bf16[2,4,8,256], index: 5, kind: output, shape index: {}]
  %s6 = sld [smem:[#allocation0]]
  $region77: #{tpu_custom_call.1} parent=0
    _
  %s8 = ssub.s32 1, %s6
  %s9 = scalar_select 0, %s8, %s6
  $region1: #{tpu_custom_call.1} parent=0
    #allocation4 [shape = 'u8[4096]{0}', space=vmem, size = 0x1000, scoped, tag = 'input window, operand 0']
    #allocation5 [shape = 's32[2]{0}', space=sflag, size = 0x8, scoped, tag = 'scoped memory for tpu_custom_call.1']
    #allocation6 [shape = 's32[2]{0}', space=sflag, size = 0x8, scoped, tag = 'scoped memory for tpu_custom_call.1']
    #allocation7 [shape = 'u8[8192]{0}', space=vmem, size = 0x2000, scoped, tag = 'input window, operand 1']
    #allocation8 [shape = 's32[2]{0}', space=sflag, size = 0x8, scoped, tag = 'scoped memory for tpu_custom_call.1']
    #allocation9 [shape = 'u8[8192]{0}', space=vmem, size = 0x2000, scoped, tag = 'input window, operand 2, single buffered']
    #allocation10 [shape = 'u8[4096]{0}', space=vmem, size = 0x1000, scoped, tag = 'input window, operand 3, single buffered']
    #allocation11 [shape = 's32[1]{0}', space=sflag, size = 0x4, scoped, tag = 'scoped memory for tpu_custom_call.1']
    #allocation12 [shape = 'u8[16384]{0}', space=vmem, size = 0x4000, scoped, tag = 'input window, operand 4, single buffered']
    #allocation13 [shape = 'u8[8192]{0}', space=vmem, size = 0x2000, scoped, tag = 'output window, operand 0']
    %10 = vsyncpa [#allocation5], 0
    %s11 = scalar_lea.sflag [#allocation5], 1
    %12 = vsyncpa %s11, 0
    %13 = vsyncpa [#allocation8], 0
    %s14 = scalar_lea.sflag [#allocation8], 1
    %15 = vsyncpa %s14, 0
    %16 = vsyncpa [#allocation11], 0
    %17 = vsyncpa [#allocation6], 0
    %s18 = scalar_lea.sflag [#allocation6], 1
    %19 = vsyncpa %s18, 0
    loop: start=0, step=1, limit=10
    $region2: #{tpu_custom_call.1} parent=1 // loop_pre_header
      _
    $region3: #{tpu_custom_call.1} parent=1 // loop_header
      %s21 = sphi 0, %s25
      %p22 = scmp.ge.s32.totalorder %s21, 10
      %s28 = sphi 0, %s40
      %s29 = sphi 0, %s36
      %s30 = sphi 0, %s28
      %s31 = sphi 0, %s29
      %s32 = sphi 0, %s30
      %s33 = sphi 0, %s31
      %s45 = sphi 0, %s47
      %s48 = sphi 0, %s45
      %s49 = sphi 0, %s48
      %s65 = sphi 0, %s49
      %s71 = sphi 0, %s73
      %s74 = sphi 0, %s71
      %s75 = sphi 0, %s74
      %s91 = sphi 0, %s75
      %s95 = sphi 0, %s95
      %s97 = sphi 0, %s95
      %s98 = sphi 0, %s97
      %s112 = sphi 0, %s98
      %s116 = sphi 0, %s116
      %s118 = sphi 0, %s116
      %s119 = sphi 0, %s118
      %s133 = sphi 0, %s119
      %s137 = sphi 0, %s137
      %s139 = sphi 0, %s137
      %s140 = sphi 0, %s139
      %s154 = sphi 0, %s140
      %s162 = sphi 0, %s164
      %s165 = sphi 0, %s162
      %s166 = sphi 0, %s165
      %s182 = sphi 0, %s166
    $region4: #{tpu_custom_call.1} parent=1 // loop_header_branch
      %24 = sbr.rel (%p22) target = $region8
    $region5: #{tpu_custom_call.1} parent=1 // loop_body
      %s26 = ssub.s32 %s21, 1
      %s27 = ssub.s32 %s21, 2
      %s34 = sadd.s32 1, %s29
      %p35 = scmp.ge.s32.totalorder %s34, 4
      %s36 = scalar_select %p35, 0, %s34
      %s37 = sadd.s32 1, %s28
      %s38 = scalar_select %p35, %s37, %s28
      %p39 = scmp.ge.s32.totalorder %s38, 2
      %s40 = scalar_select %p39, 0, %s38
      %s41 = ssub.s32 %s28, %s40
      %s42 = ssub.s32 %s29, %s36
      %s43 = sor.u32 %s41, %s42
      %p44 = scmp.eq.s32.totalorder %s43, 0
      %s46 = sadd.s32 %s45, 1
      %s47 = scalar_select %p44, %s45, %s46
      %p50 = pneg %p44
      %p51 = scmp.eq.s32.totalorder %s21, 7
      %p52 = por %p50, %p51
      %p53 = scmp.ne.s32.totalorder %s45, %s48
      %p54 = scmp.eq.s32.totalorder %s21, 0
      %p55 = por %p53, %p54
      %p56 = scmp.ne.s32.totalorder %s45, %s48
      %p57 = scmp.eq.s32.totalorder %s26, 7
      %p58 = por %p56, %p57
      %p59 = scmp.ne.s32.totalorder %s48, %s49
      %p60 = scmp.eq.s32.totalorder %s26, 0
      %p61 = por %p59, %p60
      %p62 = scmp.ne.s32.totalorder %s48, %s49
      %p63 = scmp.eq.s32.totalorder %s27, 7
      %p64 = por %p62, %p63
      %p66 = scmp.ne.s32.totalorder %s49, %s65
      %p67 = scmp.eq.s32.totalorder %s27, 0
      %p68 = por %p66, %p67
      %s69 = ssub.s32 %s28, %s40
      %p70 = scmp.eq.s32.totalorder %s69, 0
      %s72 = sadd.s32 %s71, 1
      %s73 = scalar_select %p70, %s71, %s72
      %p76 = pneg %p70
      %p77 = scmp.eq.s32.totalorder %s21, 7
      %p78 = por %p76, %p77
      %p79 = scmp.ne.s32.totalorder %s71, %s74
      %p80 = scmp.eq.s32.totalorder %s21, 0
      %p81 = por %p79, %p80
      %p82 = scmp.ne.s32.totalorder %s71, %s74
      %p83 = scmp.eq.s32.totalorder %s26, 7
      %p84 = por %p82, %p83
      %p85 = scmp.ne.s32.totalorder %s74, %s75
      %p86 = scmp.eq.s32.totalorder %s26, 0
      %p87 = por %p85, %p86
      %p88 = scmp.ne.s32.totalorder %s74, %s75
      %p89 = scmp.eq.s32.totalorder %s27, 7
      %p90 = por %p88, %p89
      %p92 = scmp.ne.s32.totalorder %s75, %s91
      %p93 = scmp.eq.s32.totalorder %s27, 0
      %p94 = por %p92, %p93
      %s96 = sadd.s32 %s95, 1
      %p99 = scmp.eq.s32.totalorder %s21, 7
      %p100 = scmp.ne.s32.totalorder %s95, %s97
      %p101 = scmp.eq.s32.totalorder %s21, 0
      %p102 = por %p100, %p101
      %p103 = scmp.ne.s32.totalorder %s95, %s97
      %p104 = scmp.eq.s32.totalorder %s26, 7
      %p105 = por %p103, %p104
      %p106 = scmp.ne.s32.totalorder %s97, %s98
      %p107 = scmp.eq.s32.totalorder %s26, 0
      %p108 = por %p106, %p107
      %p109 = scmp.ne.s32.totalorder %s97, %s98
      %p110 = scmp.eq.s32.totalorder %s27, 7
      %p111 = por %p109, %p110
      %p113 = scmp.ne.s32.totalorder %s98, %s112
      %p114 = scmp.eq.s32.totalorder %s27, 0
      %p115 = por %p113, %p114
      %s117 = sadd.s32 %s116, 1
      %p120 = scmp.eq.s32.totalorder %s21, 7
      %p121 = scmp.ne.s32.totalorder %s116, %s118
      %p122 = scmp.eq.s32.totalorder %s21, 0
      %p123 = por %p121, %p122
      %p124 = scmp.ne.s32.totalorder %s116, %s118
      %p125 = scmp.eq.s32.totalorder %s26, 7
      %p126 = por %p124, %p125
      %p127 = scmp.ne.s32.totalorder %s118, %s119
      %p128 = scmp.eq.s32.totalorder %s26, 0
      %p129 = por %p127, %p128
      %p130 = scmp.ne.s32.totalorder %s118, %s119
      %p131 = scmp.eq.s32.totalorder %s27, 7
      %p132 = por %p130, %p131
      %p134 = scmp.ne.s32.totalorder %s119, %s133
      %p135 = scmp.eq.s32.totalorder %s27, 0
      %p136 = por %p134, %p135
      %s138 = sadd.s32 %s137, 1
      %p141 = scmp.eq.s32.totalorder %s21, 7
      %p142 = scmp.ne.s32.totalorder %s137, %s139
      %p143 = scmp.eq.s32.totalorder %s21, 0
      %p144 = por %p142, %p143
      %p145 = scmp.ne.s32.totalorder %s137, %s139
      %p146 = scmp.eq.s32.totalorder %s26, 7
      %p147 = por %p145, %p146
      %p148 = scmp.ne.s32.totalorder %s139, %s140
      %p149 = scmp.eq.s32.totalorder %s26, 0
      %p150 = por %p148, %p149
      %p151 = scmp.ne.s32.totalorder %s139, %s140
      %p152 = scmp.eq.s32.totalorder %s27, 7
      %p153 = por %p151, %p152
      %p155 = scmp.ne.s32.totalorder %s140, %s154
      %p156 = scmp.eq.s32.totalorder %s27, 0
      %p157 = por %p155, %p156
      %s158 = ssub.s32 %s28, %s40
      %s159 = ssub.s32 %s29, %s36
      %s160 = sor.u32 %s158, %s159
      %p161 = scmp.eq.s32.totalorder %s160, 0
      %s163 = sadd.s32 %s162, 1
      %s164 = scalar_select %p161, %s162, %s163
      %p167 = pneg %p161
      %p168 = scmp.eq.s32.totalorder %s21, 7
      %p169 = por %p167, %p168
      %p170 = scmp.ne.s32.totalorder %s162, %s165
      %p171 = scmp.eq.s32.totalorder %s21, 0
      %p172 = por %p170, %p171
      %p173 = scmp.ne.s32.totalorder %s162, %s165
      %p174 = scmp.eq.s32.totalorder %s26, 7
      %p175 = por %p173, %p174
      %p176 = scmp.ne.s32.totalorder %s165, %s166
      %p177 = scmp.eq.s32.totalorder %s26, 0
      %p178 = por %p176, %p177
      %p179 = scmp.ne.s32.totalorder %s165, %s166
      %p180 = scmp.eq.s32.totalorder %s27, 7
      %p181 = por %p179, %p180
      %p183 = scmp.ne.s32.totalorder %s166, %s182
      %p184 = scmp.eq.s32.totalorder %s27, 0
      %p185 = por %p183, %p184
      %p186 = scmp.le.s32.totalorder 1, %s21
      %p187 = scmp.lt.s32.totalorder %s21, 9
      %p188 = pnand %p186, %p187
      %p189 = pneg %p188
      // Predicated region
      $region9: #{tpu_custom_call.1} parent=5 // pred_check
        _
      $region10: #{tpu_custom_call.1} parent=5 // pred_check_branch
        %191 = sbr.rel (%p188) target = $region12
      $region11: #{tpu_custom_call.1} parent=5 // pred_region
        %s192 = ssub.s32 %s21, 1
        // Predicated region
        $region13: #{tpu_custom_call.1} parent=11 // pred_check
          %p193 = pneg %p108
        $region14: #{tpu_custom_call.1} parent=11 // pred_check_branch
          %195 = sbr.rel (%p193) target = $region16
        $region15: #{tpu_custom_call.1} parent=11 // pred_region
          %s197 = ssub.s32 256, 256
          %198 = vsyncadd [#allocation8], %s197
          %s199 = sshll.u32 [#allocation9], 4
          %s200 = int_to_ptr.vmem [resolvable:$true] %s199
          %205 = dma.hbm_to_vmem [thread:$0]  %s2, 256, %s200, [#allocation8], 128, 128, 8
        $region16: #{tpu_custom_call.1} parent=11 // pred_fallthru
          _
        // Predicated region
        $region17: #{tpu_custom_call.1} parent=11 // pred_check
          %p206 = pneg %p129
        $region18: #{tpu_custom_call.1} parent=11 // pred_check_branch
          %208 = sbr.rel (%p206) target = $region20
        $region19: #{tpu_custom_call.1} parent=11 // pred_region
          %s210 = ssub.s32 128, 128
          %211 = vsyncadd [#allocation11], %s210
          %s213 = sshll.u32 [#allocation10], 4
          %s214 = int_to_ptr.vmem [resolvable:$true] %s213
          %216 = dma.hbm_to_vmem [thread:$0]  %s3, 128, %s214, [#allocation11]
        $region20: #{tpu_custom_call.1} parent=11 // pred_fallthru
          _
        // Predicated region
        $region21: #{tpu_custom_call.1} parent=11 // pred_check
          %p217 = pneg %p150
        $region22: #{tpu_custom_call.1} parent=11 // pred_check_branch
          %219 = sbr.rel (%p217) target = $region24
        $region23: #{tpu_custom_call.1} parent=11 // pred_region
          %s221 = ssub.s32 512, 512
          %222 = vsyncadd [#allocation11], %s221
          %s223 = sshll.u32 [#allocation12], 4
          %s224 = int_to_ptr.vmem [resolvable:$true] %s223
          %229 = dma.hbm_to_vmem [thread:$0]  %s4, 512, %s224, [#allocation11], 256, 256, 16
        $region24: #{tpu_custom_call.1} parent=11 // pred_fallthru
          _
      $region12: #{tpu_custom_call.1} parent=5 // pred_fallthru
        _
      %p230 = scmp.lt.s32.totalorder %s21, 8
      // Predicated region
      $region25: #{tpu_custom_call.1} parent=5 // pred_check
        %p231 = pneg %p230
      $region26: #{tpu_custom_call.1} parent=5 // pred_check_branch
        %233 = sbr.rel (%p231) target = $region28
      $region27: #{tpu_custom_call.1} parent=5 // pred_region
        // Predicated region
        $region29: #{tpu_custom_call.1} parent=27 // pred_check
          %p234 = pneg %p55
        $region30: #{tpu_custom_call.1} parent=27 // pred_check_branch
          %236 = sbr.rel (%p234) target = $region32
        $region31: #{tpu_custom_call.1} parent=27 // pred_region
          %s237 = sand.u32 %s45, 1
          %s238 = scalar_lea.sflag [#allocation5], %s237
          %s239 = sand.u32 %s45, 1
          %s240 = smul.addr %s239, 4
          %s241 = scalar_lea.vmem [#allocation4], %s240
          %s243 = ssub.s32 64, 64
          %244 = vsyncadd %s238, %s243
          %s245 = smul.addr %s29, 2
          %s246 = smul.addr %s28, 8
          %s247 = sadd.s32 %s245, %s246
          %s248 = smul.addr %s247, 32
          %s249 = scalar_lea.hbm %s0, %s248
          %s251 = sshll.u32 %s241, 4
          %s252 = int_to_ptr.vmem [resolvable:$true] %s251
          %254 = dma.hbm_to_vmem [thread:$0]  %s249, 64, %s252, %s238
        $region32: #{tpu_custom_call.1} parent=27 // pred_fallthru
          _
        // Predicated region
        $region33: #{tpu_custom_call.1} parent=27 // pred_check
          %p255 = pneg %p81
        $region34: #{tpu_custom_call.1} parent=27 // pred_check_branch
          %257 = sbr.rel (%p255) target = $region36
        $region35: #{tpu_custom_call.1} parent=27 // pred_region
          %s258 = sand.u32 %s21, 1
          %s259 = scalar_lea.sflag [#allocation8], %s258
          %s260 = sand.u32 %s71, 1
          %s261 = smul.addr %s260, 8
          %s262 = scalar_lea.vmem [#allocation7], %s261
          %s264 = ssub.s32 128, 128
          %265 = vsyncadd %s259, %s264
          %s266 = smul.addr %s28, 2
          %s267 = smul.addr %s266, 64
          %s268 = scalar_lea.hbm %s1, %s267
          %s270 = sshll.u32 %s262, 4
          %s271 = int_to_ptr.vmem [resolvable:$true] %s270
          %273 = dma.hbm_to_vmem [thread:$0]  %s268, 128, %s271, %s259
        $region36: #{tpu_custom_call.1} parent=27 // pred_fallthru
          _
      $region28: #{tpu_custom_call.1} parent=5 // pred_fallthru
        _
      %p274 = scmp.le.s32.totalorder 1, %s21
      %p275 = scmp.lt.s32.totalorder %s21, 9
      %p276 = pnand %p274, %p275
      %p277 = pneg %p276
      // Predicated region
      $region37: #{tpu_custom_call.1} parent=5 // pred_check
        _
      $region38: #{tpu_custom_call.1} parent=5 // pred_check_branch
        %279 = sbr.rel (%p276) target = $region40
      $region39: #{tpu_custom_call.1} parent=5 // pred_region
        %s280 = ssub.s32 %s21, 1
        %s281 = sand.u32 %s48, 1
        %s282 = scalar_lea.sflag [#allocation5], %s281
        %s283 = sand.u32 %s48, 1
        %s284 = smul.addr %s283, 4
        %s285 = scalar_lea.vmem [#allocation4], %s284
        // Predicated region
        $region41: #{tpu_custom_call.1} parent=39 // pred_check
          %p286 = pneg %p61
        $region42: #{tpu_custom_call.1} parent=39 // pred_check_branch
          %288 = sbr.rel (%p286) target = $region44
        $region43: #{tpu_custom_call.1} parent=39 // pred_region
          %289 = dma.done %s282, 64
        $region44: #{tpu_custom_call.1} parent=39 // pred_fallthru
          _
        %s290 = sand.u32 %s26, 1
        %s291 = scalar_lea.sflag [#allocation8], %s290
        %s292 = sand.u32 %s74, 1
        %s293 = smul.addr %s292, 8
        %s294 = scalar_lea.vmem [#allocation7], %s293
        // Predicated region
        $region45: #{tpu_custom_call.1} parent=39 // pred_check
          %p295 = pneg %p87
        $region46: #{tpu_custom_call.1} parent=39 // pred_check_branch
          %297 = sbr.rel (%p295) target = $region48
        $region47: #{tpu_custom_call.1} parent=39 // pred_region
          %298 = dma.done %s291, 128
        $region48: #{tpu_custom_call.1} parent=39 // pred_fallthru
          _
        // Predicated region
        $region49: #{tpu_custom_call.1} parent=39 // pred_check
          %p299 = pneg %p108
        $region50: #{tpu_custom_call.1} parent=39 // pred_check_branch
          %301 = sbr.rel (%p299) target = $region52
        $region51: #{tpu_custom_call.1} parent=39 // pred_region
          %302 = dma.done [#allocation8], 256
        $region52: #{tpu_custom_call.1} parent=39 // pred_fallthru
          _
        // Predicated region
        $region53: #{tpu_custom_call.1} parent=39 // pred_check
          %p303 = pneg %p129
        $region54: #{tpu_custom_call.1} parent=39 // pred_check_branch
          %305 = sbr.rel (%p303) target = $region56
        $region55: #{tpu_custom_call.1} parent=39 // pred_region
          %306 = dma.done [#allocation11], 128
        $region56: #{tpu_custom_call.1} parent=39 // pred_fallthru
          _
        // Predicated region
        $region57: #{tpu_custom_call.1} parent=39 // pred_check
          %p307 = pneg %p150
        $region58: #{tpu_custom_call.1} parent=39 // pred_check_branch
          %309 = sbr.rel (%p307) target = $region60
        $region59: #{tpu_custom_call.1} parent=39 // pred_region
          %310 = dma.done [#allocation11], 512
        $region60: #{tpu_custom_call.1} parent=39 // pred_fallthru
          _
        %s311 = sand.u32 %s48, 1
        %s312 = scalar_lea.sflag [#allocation5], %s311
        %s313 = sand.u32 %s48, 1
        %s314 = smul.addr %s313, 4
        %s315 = scalar_lea.vmem [#allocation4], %s314
        %p316 = pneg %p61
        %p317 = pneg %p58
        %s318 = sand.u32 %s26, 1
        %s319 = scalar_lea.sflag [#allocation8], %s318
        %s320 = sand.u32 %s74, 1
        %s321 = smul.addr %s320, 8
        %s322 = scalar_lea.vmem [#allocation7], %s321
        %p323 = pneg %p87
        %p324 = pneg %p84
        %p325 = pneg %p108
        %p326 = pneg %p105
        %p327 = pneg %p129
        %p328 = pneg %p126
        %p329 = pneg %p150
        %p330 = pneg %p147
        %p331 = pneg %p178
        %p332 = pneg %p175
        %s333 = sand.u32 %s165, 1
        %s334 = scalar_lea.sflag [#allocation6], %s333
        %s335 = sand.u32 %s165, 1
        %s336 = smul.addr %s335, 8
        %s337 = scalar_lea.vmem [#allocation13], %s336
        %p340 = scmp.eq.s32.totalorder %s31, 0
        // Predicated region
        $region61: #{tpu_custom_call.1} parent=39 // pred_check
          %p341 = pneg %p340
        $region62: #{tpu_custom_call.1} parent=39 // pred_check_branch
          %343 = sbr.rel (%p341) target = $region64
        $region63: #{tpu_custom_call.1} parent=39 // pred_region
          %vm344 = vcmask 1040384
          %vm345 = vsmask.f32 256
          %vm346 = vmand %vm344, %vm345
          %vm347 = vcmask 1044484
          %vm348 = vsmask.f32 4352
          %vm349 = vmand %vm347, %vm348
          %vm350 = vmor %vm349, %vm346
          %v351 = vld [vmem:[#allocation3] sm:$0x11]
          %v352 = vsel %vm350, 1065369472, %v351
          %353 = vst [vmem:[#allocation3] sm:$0x11] %v352
          %vm354 = vcmask 1043456
          %vm355 = vsmask.f32 7938
          %vm356 = vmand %vm354, %vm355
          %vm357 = vcmask 1047556
          %vm358 = vsmask.f32 7954
          %vm359 = vmand %vm357, %vm358
          %vm360 = vmor %vm359, %vm356
          %v361 = vld [vmem:[#allocation3] sm:$0xff]
          %v362 = vsel %vm360, 0, %v361
          %363 = vst [vmem:[#allocation3] sm:$0xff] %v362
          %364 = vst [vmem:[#allocation3 + $0x8] sm:$0xcc] 0
          %365 = vst [vmem:[#allocation3 + $0x10] sm:$0xcc] 0
          %366 = vst [vmem:[#allocation3 + $0x18] sm:$0xcc] 0
          %367 = vst [vmem:[#allocation3 + $0x20] sm:$0xcc] 0
          %368 = vst [vmem:[#allocation3 + $0x28] sm:$0xcc] 0
          %369 = vst [vmem:[#allocation3 + $0x30] sm:$0xcc] 0
          %370 = vst [vmem:[#allocation3 + $0x38] sm:$0xcc] 0
          %371 = vst [vmem:[#allocation3 + $0x40] sm:$0xcc] 0
          %372 = vst [vmem:[#allocation3 + $0x48] sm:$0xcc] 0
          %v373 = vld [vmem:[%s294] sm:$0xff]
          %v374 = vunpack.c.l.bf16 %v373
          %v375 = vunpack.c.h.bf16 %v373
          %376 = vst [vmem:[#allocation2] sm:$0xff] %v374
          %377 = vst [vmem:[#allocation2 + $0x8] sm:$0xff] %v375
        $region64: #{tpu_custom_call.1} parent=39 // pred_fallthru
          _
        %v378 = vld [vmem:[%s285] sm:$0xf]
        %v379 = vunpack.c.l.bf16 %v378
        %v380 = vld [vmem:[#allocation2] sm:$0xff]
        %v381 = vld [vmem:[#allocation2 + $0x8] sm:$0xff]
        %v383 = vcombine.high %v379, %v379
        %385 = vrot.lane.b32.xlu0 %v379, 17
        %v386 = vpop.permute.xlu0 %385
        %387 = vrot.lane.b32.xlu0 %v383, 17
        %v388 = vpop.permute.xlu0 %387
        %v389 = vlaneseq
        %v390 = vand.u32 %v389, 127
        %vm391 = vcmp.lt.s32.totalorder %v390, 17
        %v392 = vsel %vm391, %v386, %v388
        %v393 = vsel %vm391, %v388, %v386
        %v394 = vld [vmem:[#allocation12] ss:$8 sm:$0x3]
        %v396 = vlaneseq
        %v397 = vshrl.u32 %v396, 7
        %v398 = vsub.s32 0, %v397
        %v399 = vrot.slane %v394, %v398
        %v400 = vlaneseq
        %v401 = vshrl.u32 %v400, 7
        %v402 = vsub.s32 1, %v401
        %v403 = vrot.slane %v394, %v402
        %v406 = vmul.f32 %v393, %v399
        %v407 = vmul.f32 %v392, %v403
        %v408 = vpack.c.bf16 %v406, %v406
        %v409 = vpack.c.bf16 %v407, %v407
        %v412 = vunpack.c.l.b16 %v408
        %v413 = vunpack.c.l.b16 %v409
        %v414 = vpack.c.b16 %v413, %v412
        %416 = vst [vmem:[#allocation3 + $0x8] sm:$0x33] %v414
        %417 = vrot.lane.b32.xlu0 %v379, 16
        %v418 = vpop.permute.xlu0 %417
        %419 = vrot.lane.b32.xlu0 %v383, 16
        %v420 = vpop.permute.xlu0 %419
        %vm421 = vcmp.lt.s32.totalorder %v390, 16
        %v422 = vsel %vm421, %v418, %v420
        %v423 = vsel %vm421, %v420, %v418
        %s424 = scalar_lea.vmem [#allocation12], 1
        %v425 = vld [vmem:[%s424] ss:$8 sm:$0x3]
        %v427 = vlaneseq
        %v428 = vshrl.u32 %v427, 7
        %v429 = vsub.s32 0, %v428
        %v430 = vrot.slane %v425, %v429
        %v431 = vlaneseq
        %v432 = vshrl.u32 %v431, 7
        %v433 = vsub.s32 1, %v432
        %v434 = vrot.slane %v425, %v433
        %v437 = vmul.f32 %v423, %v430
        %v438 = vmul.f32 %v422, %v434
        %v439 = vpack.c.bf16 %v437, %v437
        %v440 = vpack.c.bf16 %v438, %v438
        %v443 = vunpack.c.l.b16 %v439
        %v444 = vunpack.c.l.b16 %v440
        %v445 = vpack.c.b16 %v444, %v443
        %447 = vst [vmem:[#allocation3 + $0x10] sm:$0x33] %v445
        %448 = vrot.lane.b32.xlu0 %v379, 15
        %v449 = vpop.permute.xlu0 %448
        %450 = vrot.lane.b32.xlu0 %v383, 15
        %v451 = vpop.permute.xlu0 %450
        %vm452 = vcmp.lt.s32.totalorder %v390, 15
        %v453 = vsel %vm452, %v449, %v451
        %v454 = vsel %vm452, %v451, %v449
        %s455 = scalar_lea.vmem [#allocation12], 2
        %v456 = vld [vmem:[%s455] ss:$8 sm:$0x3]
        %v458 = vlaneseq
        %v459 = vshrl.u32 %v458, 7
        %v460 = vsub.s32 0, %v459
        %v461 = vrot.slane %v456, %v460
        %v462 = vlaneseq
        %v463 = vshrl.u32 %v462, 7
        %v464 = vsub.s32 1, %v463
        %v465 = vrot.slane %v456, %v464
        %v468 = vmul.f32 %v454, %v461
        %v469 = vmul.f32 %v453, %v465
        %v470 = vpack.c.bf16 %v468, %v468
        %v471 = vpack.c.bf16 %v469, %v469
        %v474 = vunpack.c.l.b16 %v470
        %v475 = vunpack.c.l.b16 %v471
        %v476 = vpack.c.b16 %v475, %v474
        %478 = vst [vmem:[#allocation3 + $0x18] sm:$0x33] %v476
        %479 = vrot.lane.b32.xlu0 %v379, 1
        %v480 = vpop.permute.xlu0 %479
        %481 = vrot.lane.b32.xlu0 %v383, 1
        %v482 = vpop.permute.xlu0 %481
        %vm483 = vcmp.lt.s32.totalorder %v390, 1
        %v484 = vsel %vm483, %v480, %v482
        %v485 = vsel %vm483, %v482, %v480
        %s486 = scalar_lea.vmem [#allocation12], 3
        %v487 = vld [vmem:[%s486] ss:$8 sm:$0x3]
        %v489 = vlaneseq
        %v490 = vshrl.u32 %v489, 7
        %v491 = vsub.s32 0, %v490
        %v492 = vrot.slane %v487, %v491
        %v493 = vlaneseq
        %v494 = vshrl.u32 %v493, 7
        %v495 = vsub.s32 1, %v494
        %v496 = vrot.slane %v487, %v495
        %v499 = vmul.f32 %v485, %v492
        %v500 = vmul.f32 %v484, %v496
        %v501 = vpack.c.bf16 %v499, %v499
        %v502 = vpack.c.bf16 %v500, %v500
        %v505 = vunpack.c.l.b16 %v501
        %v506 = vunpack.c.l.b16 %v502
        %v507 = vpack.c.b16 %v506, %v505
        %509 = vst [vmem:[#allocation3 + $0x20] sm:$0x33] %v507
        %v512 = vunpack.c.l.s4 1983009808
        %v513 = vunpack.c.0.s8 %v512
        %v514 = vlaneseq
        %v515 = vshrl.u32 %v514, 7
        %v516 = vsub.s32 %v513, %v515
        %v517 = vrot.slane %v378, %v516
        %519 = vst [vmem:[#allocation3 + $0x28] sm:$0x33] %v517
        %520 = vrot.lane.b32.xlu0 %v379, 127
        %v521 = vpop.permute.xlu0 %520
        %522 = vrot.lane.b32.xlu0 %v383, 127
        %v523 = vpop.permute.xlu0 %522
        %vm524 = vcmp.lt.s32.totalorder %v390, 127
        %v525 = vsel %vm524, %v521, %v523
        %v526 = vsel %vm524, %v523, %v521
        %s527 = scalar_lea.vmem [#allocation12], 5
        %v528 = vld [vmem:[%s527] ss:$8 sm:$0x3]
        %v530 = vlaneseq
        %v531 = vshrl.u32 %v530, 7
        %v532 = vsub.s32 0, %v531
        %v533 = vrot.slane %v528, %v532
        %v534 = vlaneseq
        %v535 = vshrl.u32 %v534, 7
        %v536 = vsub.s32 1, %v535
        %v537 = vrot.slane %v528, %v536
        %v540 = vmul.f32 %v525, %v533
        %v541 = vmul.f32 %v526, %v537
        %v542 = vpack.c.bf16 %v540, %v540
        %v543 = vpack.c.bf16 %v541, %v541
        %v546 = vunpack.c.l.b16 %v542
        %v547 = vunpack.c.l.b16 %v543
        %v548 = vpack.c.b16 %v547, %v546
        %550 = vst [vmem:[#allocation3 + $0x30] sm:$0x33] %v548
        %551 = vrot.lane.b32.xlu0 %v379, 113
        %v552 = vpop.permute.xlu0 %551
        %553 = vrot.lane.b32.xlu0 %v383, 113
        %v554 = vpop.permute.xlu0 %553
        %vm555 = vcmp.lt.s32.totalorder %v390, 113
        %v556 = vsel %vm555, %v552, %v554
        %v557 = vsel %vm555, %v554, %v552
        %s558 = scalar_lea.vmem [#allocation12], 6
        %v559 = vld [vmem:[%s558] ss:$8 sm:$0x3]
        %v561 = vlaneseq
        %v562 = vshrl.u32 %v561, 7
        %v563 = vsub.s32 0, %v562
        %v564 = vrot.slane %v559, %v563
        %v565 = vlaneseq
        %v566 = vshrl.u32 %v565, 7
        %v567 = vsub.s32 1, %v566
        %v568 = vrot.slane %v559, %v567
        %v571 = vmul.f32 %v556, %v564
        %v572 = vmul.f32 %v557, %v568
        %v573 = vpack.c.bf16 %v571, %v571
        %v574 = vpack.c.bf16 %v572, %v572
        %v577 = vunpack.c.l.b16 %v573
        %v578 = vunpack.c.l.b16 %v574
        %v579 = vpack.c.b16 %v578, %v577
        %581 = vst [vmem:[#allocation3 + $0x38] sm:$0x33] %v579
        %582 = vrot.lane.b32.xlu0 %v379, 112
        %v583 = vpop.permute.xlu0 %582
        %584 = vrot.lane.b32.xlu0 %v383, 112
        %v585 = vpop.permute.xlu0 %584
        %vm586 = vcmp.lt.s32.totalorder %v390, 112
        %v587 = vsel %vm586, %v583, %v585
        %v588 = vsel %vm586, %v585, %v583
        %s589 = scalar_lea.vmem [#allocation12], 7
        %v590 = vld [vmem:[%s589] ss:$8 sm:$0x3]
        %v592 = vlaneseq
        %v593 = vshrl.u32 %v592, 7
        %v594 = vsub.s32 0, %v593
        %v595 = vrot.slane %v590, %v594
        %v596 = vlaneseq
        %v597 = vshrl.u32 %v596, 7
        %v598 = vsub.s32 1, %v597
        %v599 = vrot.slane %v590, %v598
        %v602 = vmul.f32 %v587, %v595
        %v603 = vmul.f32 %v588, %v599
        %v604 = vpack.c.bf16 %v602, %v602
        %v605 = vpack.c.bf16 %v603, %v603
        %v608 = vunpack.c.l.b16 %v604
        %v609 = vunpack.c.l.b16 %v605
        %v610 = vpack.c.b16 %v609, %v608
        %612 = vst [vmem:[#allocation3 + $0x40] sm:$0x33] %v610
        %613 = vrot.lane.b32.xlu0 %v379, 111
        %v614 = vpop.permute.xlu0 %613
        %615 = vrot.lane.b32.xlu0 %v383, 111
        %v616 = vpop.permute.xlu0 %615
        %vm617 = vcmp.lt.s32.totalorder %v390, 111
        %v618 = vsel %vm617, %v614, %v616
        %v619 = vsel %vm617, %v616, %v614
        %s620 = scalar_lea.vmem [#allocation12], 16
        %v621 = vld [vmem:[%s620] ss:$8 sm:$0x3]
        %v623 = vlaneseq
        %v624 = vshrl.u32 %v623, 7
        %v625 = vsub.s32 0, %v624
        %v626 = vrot.slane %v621, %v625
        %v627 = vlaneseq
        %v628 = vshrl.u32 %v627, 7
        %v629 = vsub.s32 1, %v628
        %v630 = vrot.slane %v621, %v629
        %v633 = vmul.f32 %v618, %v626
        %v634 = vmul.f32 %v619, %v630
        %v635 = vpack.c.bf16 %v633, %v633
        %v636 = vpack.c.bf16 %v634, %v634
        %v639 = vunpack.c.l.b16 %v635
        %v640 = vunpack.c.l.b16 %v636
        %v641 = vpack.c.b16 %v640, %v639
        %643 = vst [vmem:[#allocation3 + $0x48] sm:$0x33] %v641
        %644 = vrot.lane.b32.xlu0 %v380, 17
        %v645 = vpop.permute.xlu0 %644
        %646 = vrot.lane.b32.xlu0 %v381, 17
        %v647 = vpop.permute.xlu0 %646
        %v648 = vsel %vm391, %v645, %v647
        %v649 = vsel %vm391, %v647, %v645
        %v650 = vld [vmem:[#allocation12] ss:$8 sm:$0x3]
        %v652 = vlaneseq
        %v653 = vshrl.u32 %v652, 7
        %v654 = vsub.s32 0, %v653
        %v655 = vrot.slane %v650, %v654
        %v656 = vlaneseq
        %v657 = vshrl.u32 %v656, 7
        %v658 = vsub.s32 1, %v657
        %v659 = vrot.slane %v650, %v658
        %v662 = vmul.f32 %v649, %v655
        %v663 = vmul.f32 %v648, %v659
        %v664 = vpack.c.bf16 %v662, %v662
        %v665 = vpack.c.bf16 %v663, %v663
        %v668 = vunpack.c.l.b16 %v664
        %v669 = vunpack.c.l.b16 %v665
        %v670 = vpack.c.b16 %v669, %v668
        %672 = vst [vmem:[#allocation3 + $0x50] sm:$0xff] %v670
        %673 = vrot.lane.b32.xlu0 %v380, 16
        %v674 = vpop.permute.xlu0 %673
        %675 = vrot.lane.b32.xlu0 %v381, 16
        %v676 = vpop.permute.xlu0 %675
        %v677 = vsel %vm421, %v674, %v676
        %v678 = vsel %vm421, %v676, %v674
        %v679 = vld [vmem:[%s424] ss:$8 sm:$0x3]
        %v681 = vlaneseq
        %v682 = vshrl.u32 %v681, 7
        %v683 = vsub.s32 0, %v682
        %v684 = vrot.slane %v679, %v683
        %v685 = vlaneseq
        %v686 = vshrl.u32 %v685, 7
        %v687 = vsub.s32 1, %v686
        %v688 = vrot.slane %v679, %v687
        %v691 = vmul.f32 %v678, %v684
        %v692 = vmul.f32 %v677, %v688
        %v693 = vpack.c.bf16 %v691, %v691
        %v694 = vpack.c.bf16 %v692, %v692
        %v697 = vunpack.c.l.b16 %v693
        %v698 = vunpack.c.l.b16 %v694
        %v699 = vpack.c.b16 %v698, %v697
        %701 = vst [vmem:[#allocation3 + $0x58] sm:$0xff] %v699
        %702 = vrot.lane.b32.xlu0 %v380, 15
        %v703 = vpop.permute.xlu0 %702
        %704 = vrot.lane.b32.xlu0 %v381, 15
        %v705 = vpop.permute.xlu0 %704
        %v706 = vsel %vm452, %v703, %v705
        %v707 = vsel %vm452, %v705, %v703
        %v708 = vld [vmem:[%s455] ss:$8 sm:$0x3]
        %v710 = vlaneseq
        %v711 = vshrl.u32 %v710, 7
        %v712 = vsub.s32 0, %v711
        %v713 = vrot.slane %v708, %v712
        %v714 = vlaneseq
        %v715 = vshrl.u32 %v714, 7
        %v716 = vsub.s32 1, %v715
        %v717 = vrot.slane %v708, %v716
        %v720 = vmul.f32 %v707, %v713
        %v721 = vmul.f32 %v706, %v717
        %v722 = vpack.c.bf16 %v720, %v720
        %v723 = vpack.c.bf16 %v721, %v721
        %v726 = vunpack.c.l.b16 %v722
        %v727 = vunpack.c.l.b16 %v723
        %v728 = vpack.c.b16 %v727, %v726
        %730 = vst [vmem:[#allocation3 + $0x60] sm:$0xff] %v728
        %731 = vrot.lane.b32.xlu0 %v380, 1
        %v732 = vpop.permute.xlu0 %731
        %733 = vrot.lane.b32.xlu0 %v381, 1
        %v734 = vpop.permute.xlu0 %733
        %v735 = vsel %vm483, %v732, %v734
        %v736 = vsel %vm483, %v734, %v732
        %v737 = vld [vmem:[%s486] ss:$8 sm:$0x3]
        %v739 = vlaneseq
        %v740 = vshrl.u32 %v739, 7
        %v741 = vsub.s32 0, %v740
        %v742 = vrot.slane %v737, %v741
        %v743 = vlaneseq
        %v744 = vshrl.u32 %v743, 7
        %v745 = vsub.s32 1, %v744
        %v746 = vrot.slane %v737, %v745
        %v749 = vmul.f32 %v736, %v742
        %v750 = vmul.f32 %v735, %v746
        %v751 = vpack.c.bf16 %v749, %v749
        %v752 = vpack.c.bf16 %v750, %v750
        %v755 = vunpack.c.l.b16 %v751
        %v756 = vunpack.c.l.b16 %v752
        %v757 = vpack.c.b16 %v756, %v755
        %759 = vst [vmem:[#allocation3 + $0x68] sm:$0xff] %v757
        %v760 = vpack.c.bf16 %v380, %v380
        %v761 = vpack.c.bf16 %v381, %v381
        %v764 = vunpack.c.l.b16 %v760
        %v765 = vunpack.c.l.b16 %v761
        %v766 = vpack.c.b16 %v765, %v764
        %768 = vst [vmem:[#allocation3 + $0x70] sm:$0xff] %v766
        %769 = vrot.lane.b32.xlu0 %v380, 127
        %v770 = vpop.permute.xlu0 %769
        %771 = vrot.lane.b32.xlu0 %v381, 127
        %v772 = vpop.permute.xlu0 %771
        %v773 = vsel %vm524, %v770, %v772
        %v774 = vsel %vm524, %v772, %v770
        %v775 = vld [vmem:[%s527] ss:$8 sm:$0x3]
        %v777 = vlaneseq
        %v778 = vshrl.u32 %v777, 7
        %v779 = vsub.s32 0, %v778
        %v780 = vrot.slane %v775, %v779
        %v781 = vlaneseq
        %v782 = vshrl.u32 %v781, 7
        %v783 = vsub.s32 1, %v782
        %v784 = vrot.slane %v775, %v783
        %v787 = vmul.f32 %v773, %v780
        %v788 = vmul.f32 %v774, %v784
        %v789 = vpack.c.bf16 %v787, %v787
        %v790 = vpack.c.bf16 %v788, %v788
        %v793 = vunpack.c.l.b16 %v789
        %v794 = vunpack.c.l.b16 %v790
        %v795 = vpack.c.b16 %v794, %v793
        %797 = vst [vmem:[#allocation3 + $0x78] sm:$0xff] %v795
        %798 = vrot.lane.b32.xlu0 %v380, 113
        %v799 = vpop.permute.xlu0 %798
        %800 = vrot.lane.b32.xlu0 %v381, 113
        %v801 = vpop.permute.xlu0 %800
        %v802 = vsel %vm555, %v799, %v801
        %v803 = vsel %vm555, %v801, %v799
        %v804 = vld [vmem:[%s558] ss:$8 sm:$0x3]
        %v806 = vlaneseq
        %v807 = vshrl.u32 %v806, 7
        %v808 = vsub.s32 0, %v807
        %v809 = vrot.slane %v804, %v808
        %v810 = vlaneseq
        %v811 = vshrl.u32 %v810, 7
        %v812 = vsub.s32 1, %v811
        %v813 = vrot.slane %v804, %v812
        %v816 = vmul.f32 %v802, %v809
        %v817 = vmul.f32 %v803, %v813
        %v818 = vpack.c.bf16 %v816, %v816
        %v819 = vpack.c.bf16 %v817, %v817
        %v822 = vunpack.c.l.b16 %v818
        %v823 = vunpack.c.l.b16 %v819
        %v824 = vpack.c.b16 %v823, %v822
        %826 = vst [vmem:[#allocation3 + $0x80] sm:$0xff] %v824
        %827 = vrot.lane.b32.xlu0 %v380, 112
        %v828 = vpop.permute.xlu0 %827
        %829 = vrot.lane.b32.xlu0 %v381, 112
        %v830 = vpop.permute.xlu0 %829
        %v831 = vsel %vm586, %v828, %v830
        %v832 = vsel %vm586, %v830, %v828
        %v833 = vld [vmem:[%s589] ss:$8 sm:$0x3]
        %v835 = vlaneseq
        %v836 = vshrl.u32 %v835, 7
        %v837 = vsub.s32 0, %v836
        %v838 = vrot.slane %v833, %v837
        %v839 = vlaneseq
        %v840 = vshrl.u32 %v839, 7
        %v841 = vsub.s32 1, %v840
        %v842 = vrot.slane %v833, %v841
        %v845 = vmul.f32 %v831, %v838
        %v846 = vmul.f32 %v832, %v842
        %v847 = vpack.c.bf16 %v845, %v845
        %v848 = vpack.c.bf16 %v846, %v846
        %v851 = vunpack.c.l.b16 %v847
        %v852 = vunpack.c.l.b16 %v848
        %v853 = vpack.c.b16 %v852, %v851
        %855 = vst [vmem:[#allocation3 + $0x88] sm:$0xff] %v853
        %856 = vrot.lane.b32.xlu0 %v380, 111
        %v857 = vpop.permute.xlu0 %856
        %858 = vrot.lane.b32.xlu0 %v381, 111
        %v859 = vpop.permute.xlu0 %858
        %v860 = vsel %vm617, %v857, %v859
        %v861 = vsel %vm617, %v859, %v857
        %v862 = vld [vmem:[%s620] ss:$8 sm:$0x3]
        %v864 = vlaneseq
        %v865 = vshrl.u32 %v864, 7
        %v866 = vsub.s32 0, %v865
        %v867 = vrot.slane %v862, %v866
        %v868 = vlaneseq
        %v869 = vshrl.u32 %v868, 7
        %v870 = vsub.s32 1, %v869
        %v871 = vrot.slane %v862, %v870
        %v874 = vmul.f32 %v860, %v867
        %v875 = vmul.f32 %v861, %v871
        %v876 = vpack.c.bf16 %v874, %v874
        %v877 = vpack.c.bf16 %v875, %v875
        %v880 = vunpack.c.l.b16 %v876
        %v881 = vunpack.c.l.b16 %v877
        %v882 = vpack.c.b16 %v881, %v880
        %884 = vst [vmem:[#allocation3 + $0x90] sm:$0xff] %v882
        %v885 = vld [vmem:[#allocation9] sm:$0xff]
        %v886 = vld [vmem:[#allocation9 + $0x8] sm:$0xff]
        %v887 = vld [vmem:[#allocation3] sm:$0xff]
        %v888 = vld [vmem:[#allocation3 + $0x8] sm:$0xff]
        %v889 = vld [vmem:[#allocation3 + $0x10] sm:$0xff]
        %v890 = vld [vmem:[#allocation3 + $0x18] sm:$0xff]
        %v891 = vld [vmem:[#allocation3 + $0x20] sm:$0xff]
        %v892 = vld [vmem:[#allocation3 + $0x28] sm:$0xff]
        %v893 = vld [vmem:[#allocation3 + $0x30] sm:$0xff]
        %v894 = vld [vmem:[#allocation3 + $0x38] sm:$0xff]
        %v895 = vld [vmem:[#allocation3 + $0x40] sm:$0xff]
        %v896 = vld [vmem:[#allocation3 + $0x48] sm:$0xff]
        %v897 = vld [vmem:[#allocation3 + $0x50] sm:$0xff]
        %v898 = vld [vmem:[#allocation3 + $0x58] sm:$0xff]
        %v899 = vld [vmem:[#allocation3 + $0x60] sm:$0xff]
        %v900 = vld [vmem:[#allocation3 + $0x68] sm:$0xff]
        %v901 = vld [vmem:[#allocation3 + $0x70] sm:$0xff]
        %v902 = vld [vmem:[#allocation3 + $0x78] sm:$0xff]
        %v903 = vld [vmem:[#allocation3 + $0x80] sm:$0xff]
        %v904 = vld [vmem:[#allocation3 + $0x88] sm:$0xff]
        %v905 = vld [vmem:[#allocation3 + $0x90] sm:$0xff]
        %v908 = vunpack.c.l.b16 %v885
        %v909 = vunpack.c.h.b16 %v885
        %v910 = vunpack.c.l.b16 %v886
        %v911 = vunpack.c.h.b16 %v886
        %v912 = vpack.c.b16 %v910, %v908
        %v913 = vpack.c.b16 %v911, %v909
        %v934 = vunpack.c.l.b16 %v887
        %v935 = vunpack.c.h.b16 %v887
        %v936 = vunpack.c.l.b16 %v888
        %v937 = vunpack.c.h.b16 %v888
        %v938 = vunpack.c.l.b16 %v889
        %v939 = vunpack.c.h.b16 %v889
        %v940 = vunpack.c.l.b16 %v890
        %v941 = vunpack.c.h.b16 %v890
        %v942 = vunpack.c.l.b16 %v891
        %v943 = vunpack.c.h.b16 %v891
        %v944 = vunpack.c.l.b16 %v892
        %v945 = vunpack.c.h.b16 %v892
        %v946 = vunpack.c.l.b16 %v893
        %v947 = vunpack.c.h.b16 %v893
        %v948 = vunpack.c.l.b16 %v894
        %v949 = vunpack.c.h.b16 %v894
        %v950 = vunpack.c.l.b16 %v895
        %v951 = vunpack.c.h.b16 %v895
        %v952 = vunpack.c.l.b16 %v896
        %v953 = vunpack.c.h.b16 %v896
        %v954 = vunpack.c.l.b16 %v897
        %v955 = vunpack.c.h.b16 %v897
        %v956 = vunpack.c.l.b16 %v898
        %v957 = vunpack.c.h.b16 %v898
        %v958 = vunpack.c.l.b16 %v899
        %v959 = vunpack.c.h.b16 %v899
        %v960 = vunpack.c.l.b16 %v900
        %v961 = vunpack.c.h.b16 %v900
        %v962 = vunpack.c.l.b16 %v901
        %v963 = vunpack.c.h.b16 %v901
        %v964 = vunpack.c.l.b16 %v902
        %v965 = vunpack.c.h.b16 %v902
        %v966 = vunpack.c.l.b16 %v903
        %v967 = vunpack.c.h.b16 %v903
        %v968 = vunpack.c.l.b16 %v904
        %v969 = vunpack.c.h.b16 %v904
        %v970 = vunpack.c.l.b16 %v905
        %v971 = vunpack.c.h.b16 %v905
        %v972 = vpack.c.b16 %v936, %v934
        %v973 = vpack.c.b16 %v937, %v935
        %v974 = vpack.c.b16 %v940, %v938
        %v975 = vpack.c.b16 %v941, %v939
        %v976 = vpack.c.b16 %v944, %v942
        %v977 = vpack.c.b16 %v945, %v943
        %v978 = vpack.c.b16 %v948, %v946
        %v979 = vpack.c.b16 %v949, %v947
        %v980 = vpack.c.b16 %v952, %v950
        %v981 = vpack.c.b16 %v953, %v951
        %v982 = vpack.c.b16 %v956, %v954
        %v983 = vpack.c.b16 %v957, %v955
        %v984 = vpack.c.b16 %v960, %v958
        %v985 = vpack.c.b16 %v961, %v959
        %v986 = vpack.c.b16 %v964, %v962
        %v987 = vpack.c.b16 %v965, %v963
        %v988 = vpack.c.b16 %v968, %v966
        %v989 = vpack.c.b16 %v969, %v967
        %v990 = vpack.c.b16 %v970, %v970
        %v991 = vpack.c.b16 %v971, %v971
        %vm1010 = vcmask 195584
        %v1012 = vsel %vm1010, %v913, 0
        %vm1014 = vcmask 1043456
        %v1016 = vsel %vm1014, %v990, 0
        %v1019 = vsel %vm1014, %v991, 0
        %1021 = vmatprep.subr.bf16.mxu0 %v987
        %1022 = vmatpush1.bf16.msra.mxu0 %v986
        %1023 = vmatprep.subr.bf16.mxu0 %v985
        %1024 = vmatpush1.bf16.msra.mxu0 %v984
        %1025 = vmatprep.subr.bf16.mxu0 %v983
        %1026 = vmatpush1.bf16.msra.mxu0 %v982
        %1027 = vmatprep.subr.bf16.mxu0 %v981
        %1028 = vmatpush1.bf16.msra.mxu0 %v980
        %1029 = vmatprep.subr.bf16.mxu0 %v979
        %1030 = vmatpush1.bf16.msra.mxu0 %v978
        %1031 = vmatprep.subr.bf16.mxu0 %v977
        %1032 = vmatpush1.bf16.msra.mxu0 %v976
        %1033 = vmatprep.subr.bf16.mxu0 %v975
        %1034 = vmatpush1.bf16.msra.mxu0 %v974
        %1035 = vmatprep.subr.bf16.mxu0 %v973
        %1036 = vmatpush1.bf16.msra.mxu0 %v972
        %1037 = vmatprep.subr.bf16.mxu0 0
        %1038 = vmatpush2.bf16.msra.mxu0 0
        %1039 = vmatprep.subr.bf16.mxu0 0
        %1040 = vmatpush2.bf16.msra.mxu0 0
        %1041 = vmatprep.subr.bf16.mxu0 0
        %1042 = vmatpush2.bf16.msra.mxu0 0
        %1043 = vmatprep.subr.bf16.mxu0 0
        %1044 = vmatpush2.bf16.msra.mxu0 0
        %1045 = vmatprep.subr.bf16.mxu0 0
        %1046 = vmatpush2.bf16.msra.mxu0 0
        %1047 = vmatprep.subr.bf16.mxu0 0
        %1048 = vmatpush2.bf16.msra.mxu0 0
        %1049 = vmatprep.subr.bf16.mxu0 %v1019
        %1050 = vmatpush2.bf16.msra.mxu0 %v1016
        %1051 = vmatprep.subr.bf16.mxu0 %v989
        %1052 = vmatpush2.bf16.msra.mxu0 %v988
        %1053 = vmatprep.mubr.bf16.mxu0 %v1012
        %1054 = vmatmul.mubr.bf16.gmra.mxu0 %v912
        %v1055 = vpop.f32.mrf.mxu0
        %v1056 = vadd.f32 0.0, %v1055
        %v1057 = vpop.f32.mrf.mxu0
        %v1058 = vadd.f32 0.0, %v1057
        %v1059 = vpop.f32.mrf.mxu0
        %v1060 = vadd.f32 0.0, %v1059
        %v1061 = vpop.f32.mrf.mxu0
        %v1062 = vadd.f32 0.0, %v1061
        %1063 = vdwg.mxu0
        %v1064 = vxor.u32 %v1056, 2147483648
        %v1065 = vxor.u32 %v1058, 2147483648
        %v1066 = vmul.f32 %v1064, 1.442695
        %v1067 = vpow.pop %v1066
        %v1068 = vmul.f32 %v1065, 1.442695
        %v1069 = vpow.pop %v1068
        %v1070 = vadd.f32 %v1067, 1.0
        %v1071 = vadd.f32 %v1069, 1.0
        %v1072 = vrcp.pop %v1070
        %v1073 = vmul.f32 1.0, %v1072
        %v1074 = vrcp.pop %v1071
        %v1075 = vmul.f32 1.0, %v1074
        %v1076 = vxor.u32 %v1060, 2147483648
        %v1077 = vxor.u32 %v1062, 2147483648
        %v1078 = vmul.f32 %v1076, 1.442695
        %v1079 = vpow.pop %v1078
        %v1080 = vmul.f32 %v1077, 1.442695
        %v1081 = vpow.pop %v1080
        %v1082 = vadd.f32 %v1079, 1.0
        %v1083 = vadd.f32 %v1081, 1.0
        %v1084 = vrcp.pop %v1082
        %v1085 = vmul.f32 1.0, %v1084
        %v1086 = vrcp.pop %v1083
        %v1087 = vmul.f32 1.0, %v1086
        %v1088 = vmul.f32 %v1073, %v380
        %v1089 = vmul.f32 %v1075, %v381
        %1090 = vrot.lane.b32.xlu0 %v1088, 17
        %v1091 = vpop.permute.xlu0 %1090
        %1092 = vrot.lane.b32.xlu0 %v1089, 17
        %v1093 = vpop.permute.xlu0 %1092
        %v1094 = vsel %vm391, %v1091, %v1093
        %v1095 = vsel %vm391, %v1093, %v1091
        %v1096 = vld [vmem:[#allocation12] ss:$8 sm:$0x3]
        %v1098 = vlaneseq
        %v1099 = vshrl.u32 %v1098, 7
        %v1100 = vsub.s32 0, %v1099
        %v1101 = vrot.slane %v1096, %v1100
        %v1102 = vlaneseq
        %v1103 = vshrl.u32 %v1102, 7
        %v1104 = vsub.s32 1, %v1103
        %v1105 = vrot.slane %v1096, %v1104
        %v1108 = vmul.f32 %v1095, %v1101
        %v1109 = vmul.f32 %v1094, %v1105
        %v1110 = vpack.c.bf16 %v1108, %v1108
        %v1111 = vpack.c.bf16 %v1109, %v1109
        %v1114 = vunpack.c.l.b16 %v1110
        %v1115 = vunpack.c.l.b16 %v1111
        %v1116 = vpack.c.b16 %v1115, %v1114
        %1118 = vst [vmem:[#allocation3 + $0x50] sm:$0xff] %v1116
        %1119 = vrot.lane.b32.xlu0 %v1088, 16
        %v1120 = vpop.permute.xlu0 %1119
        %1121 = vrot.lane.b32.xlu0 %v1089, 16
        %v1122 = vpop.permute.xlu0 %1121
        %v1123 = vsel %vm421, %v1120, %v1122
        %v1124 = vsel %vm421, %v1122, %v1120
        %v1125 = vld [vmem:[%s424] ss:$8 sm:$0x3]
        %v1127 = vlaneseq
        %v1128 = vshrl.u32 %v1127, 7
        %v1129 = vsub.s32 0, %v1128
        %v1130 = vrot.slane %v1125, %v1129
        %v1131 = vlaneseq
        %v1132 = vshrl.u32 %v1131, 7
        %v1133 = vsub.s32 1, %v1132
        %v1134 = vrot.slane %v1125, %v1133
        %v1137 = vmul.f32 %v1124, %v1130
        %v1138 = vmul.f32 %v1123, %v1134
        %v1139 = vpack.c.bf16 %v1137, %v1137
        %v1140 = vpack.c.bf16 %v1138, %v1138
        %v1143 = vunpack.c.l.b16 %v1139
        %v1144 = vunpack.c.l.b16 %v1140
        %v1145 = vpack.c.b16 %v1144, %v1143
        %1147 = vst [vmem:[#allocation3 + $0x58] sm:$0xff] %v1145
        %1148 = vrot.lane.b32.xlu0 %v1088, 15
        %v1149 = vpop.permute.xlu0 %1148
        %1150 = vrot.lane.b32.xlu0 %v1089, 15
        %v1151 = vpop.permute.xlu0 %1150
        %v1152 = vsel %vm452, %v1149, %v1151
        %v1153 = vsel %vm452, %v1151, %v1149
        %v1154 = vld [vmem:[%s455] ss:$8 sm:$0x3]
        %v1156 = vlaneseq
        %v1157 = vshrl.u32 %v1156, 7
        %v1158 = vsub.s32 0, %v1157
        %v1159 = vrot.slane %v1154, %v1158
        %v1160 = vlaneseq
        %v1161 = vshrl.u32 %v1160, 7
        %v1162 = vsub.s32 1, %v1161
        %v1163 = vrot.slane %v1154, %v1162
        %v1166 = vmul.f32 %v1153, %v1159
        %v1167 = vmul.f32 %v1152, %v1163
        %v1168 = vpack.c.bf16 %v1166, %v1166
        %v1169 = vpack.c.bf16 %v1167, %v1167
        %v1172 = vunpack.c.l.b16 %v1168
        %v1173 = vunpack.c.l.b16 %v1169
        %v1174 = vpack.c.b16 %v1173, %v1172
        %1176 = vst [vmem:[#allocation3 + $0x60] sm:$0xff] %v1174
        %1177 = vrot.lane.b32.xlu0 %v1088, 1
        %v1178 = vpop.permute.xlu0 %1177
        %1179 = vrot.lane.b32.xlu0 %v1089, 1
        %v1180 = vpop.permute.xlu0 %1179
        %v1181 = vsel %vm483, %v1178, %v1180
        %v1182 = vsel %vm483, %v1180, %v1178
        %v1183 = vld [vmem:[%s486] ss:$8 sm:$0x3]
        %v1185 = vlaneseq
        %v1186 = vshrl.u32 %v1185, 7
        %v1187 = vsub.s32 0, %v1186
        %v1188 = vrot.slane %v1183, %v1187
        %v1189 = vlaneseq
        %v1190 = vshrl.u32 %v1189, 7
        %v1191 = vsub.s32 1, %v1190
        %v1192 = vrot.slane %v1183, %v1191
        %v1195 = vmul.f32 %v1182, %v1188
        %v1196 = vmul.f32 %v1181, %v1192
        %v1197 = vpack.c.bf16 %v1195, %v1195
        %v1198 = vpack.c.bf16 %v1196, %v1196
        %v1201 = vunpack.c.l.b16 %v1197
        %v1202 = vunpack.c.l.b16 %v1198
        %v1203 = vpack.c.b16 %v1202, %v1201
        %1205 = vst [vmem:[#allocation3 + $0x68] sm:$0xff] %v1203
        %v1206 = vpack.c.bf16 %v1088, %v1088
        %v1207 = vpack.c.bf16 %v1089, %v1089
        %v1210 = vunpack.c.l.b16 %v1206
        %v1211 = vunpack.c.l.b16 %v1207
        %v1212 = vpack.c.b16 %v1211, %v1210
        %1214 = vst [vmem:[#allocation3 + $0x70] sm:$0xff] %v1212
        %1215 = vrot.lane.b32.xlu0 %v1088, 127
        %v1216 = vpop.permute.xlu0 %1215
        %1217 = vrot.lane.b32.xlu0 %v1089, 127
        %v1218 = vpop.permute.xlu0 %1217
        %v1219 = vsel %vm524, %v1216, %v1218
        %v1220 = vsel %vm524, %v1218, %v1216
        %v1221 = vld [vmem:[%s527] ss:$8 sm:$0x3]
        %v1223 = vlaneseq
        %v1224 = vshrl.u32 %v1223, 7
        %v1225 = vsub.s32 0, %v1224
        %v1226 = vrot.slane %v1221, %v1225
        %v1227 = vlaneseq
        %v1228 = vshrl.u32 %v1227, 7
        %v1229 = vsub.s32 1, %v1228
        %v1230 = vrot.slane %v1221, %v1229
        %v1233 = vmul.f32 %v1219, %v1226
        %v1234 = vmul.f32 %v1220, %v1230
        %v1235 = vpack.c.bf16 %v1233, %v1233
        %v1236 = vpack.c.bf16 %v1234, %v1234
        %v1239 = vunpack.c.l.b16 %v1235
        %v1240 = vunpack.c.l.b16 %v1236
        %v1241 = vpack.c.b16 %v1240, %v1239
        %1243 = vst [vmem:[#allocation3 + $0x78] sm:$0xff] %v1241
        %1244 = vrot.lane.b32.xlu0 %v1088, 113
        %v1245 = vpop.permute.xlu0 %1244
        %1246 = vrot.lane.b32.xlu0 %v1089, 113
        %v1247 = vpop.permute.xlu0 %1246
        %v1248 = vsel %vm555, %v1245, %v1247
        %v1249 = vsel %vm555, %v1247, %v1245
        %v1250 = vld [vmem:[%s558] ss:$8 sm:$0x3]
        %v1252 = vlaneseq
        %v1253 = vshrl.u32 %v1252, 7
        %v1254 = vsub.s32 0, %v1253
        %v1255 = vrot.slane %v1250, %v1254
        %v1256 = vlaneseq
        %v1257 = vshrl.u32 %v1256, 7
        %v1258 = vsub.s32 1, %v1257
        %v1259 = vrot.slane %v1250, %v1258
        %v1262 = vmul.f32 %v1248, %v1255
        %v1263 = vmul.f32 %v1249, %v1259
        %v1264 = vpack.c.bf16 %v1262, %v1262
        %v1265 = vpack.c.bf16 %v1263, %v1263
        %v1268 = vunpack.c.l.b16 %v1264
        %v1269 = vunpack.c.l.b16 %v1265
        %v1270 = vpack.c.b16 %v1269, %v1268
        %1272 = vst [vmem:[#allocation3 + $0x80] sm:$0xff] %v1270
        %1273 = vrot.lane.b32.xlu0 %v1088, 112
        %v1274 = vpop.permute.xlu0 %1273
        %1275 = vrot.lane.b32.xlu0 %v1089, 112
        %v1276 = vpop.permute.xlu0 %1275
        %v1277 = vsel %vm586, %v1274, %v1276
        %v1278 = vsel %vm586, %v1276, %v1274
        %v1279 = vld [vmem:[%s589] ss:$8 sm:$0x3]
        %v1281 = vlaneseq
        %v1282 = vshrl.u32 %v1281, 7
        %v1283 = vsub.s32 0, %v1282
        %v1284 = vrot.slane %v1279, %v1283
        %v1285 = vlaneseq
        %v1286 = vshrl.u32 %v1285, 7
        %v1287 = vsub.s32 1, %v1286
        %v1288 = vrot.slane %v1279, %v1287
        %v1291 = vmul.f32 %v1277, %v1284
        %v1292 = vmul.f32 %v1278, %v1288
        %v1293 = vpack.c.bf16 %v1291, %v1291
        %v1294 = vpack.c.bf16 %v1292, %v1292
        %v1297 = vunpack.c.l.b16 %v1293
        %v1298 = vunpack.c.l.b16 %v1294
        %v1299 = vpack.c.b16 %v1298, %v1297
        %1301 = vst [vmem:[#allocation3 + $0x88] sm:$0xff] %v1299
        %1302 = vrot.lane.b32.xlu0 %v1088, 111
        %v1303 = vpop.permute.xlu0 %1302
        %1304 = vrot.lane.b32.xlu0 %v1089, 111
        %v1305 = vpop.permute.xlu0 %1304
        %v1306 = vsel %vm617, %v1303, %v1305
        %v1307 = vsel %vm617, %v1305, %v1303
        %v1308 = vld [vmem:[%s620] ss:$8 sm:$0x3]
        %v1310 = vlaneseq
        %v1311 = vshrl.u32 %v1310, 7
        %v1312 = vsub.s32 0, %v1311
        %v1313 = vrot.slane %v1308, %v1312
        %v1314 = vlaneseq
        %v1315 = vshrl.u32 %v1314, 7
        %v1316 = vsub.s32 1, %v1315
        %v1317 = vrot.slane %v1308, %v1316
        %v1320 = vmul.f32 %v1306, %v1313
        %v1321 = vmul.f32 %v1307, %v1317
        %v1322 = vpack.c.bf16 %v1320, %v1320
        %v1323 = vpack.c.bf16 %v1321, %v1321
        %v1326 = vunpack.c.l.b16 %v1322
        %v1327 = vunpack.c.l.b16 %v1323
        %v1328 = vpack.c.b16 %v1327, %v1326
        %1330 = vst [vmem:[#allocation3 + $0x90] sm:$0xff] %v1328
        %v1331 = vld [vmem:[#allocation10] sm:$0xff]
        %v1332 = vld [vmem:[#allocation3] sm:$0xff]
        %v1333 = vld [vmem:[#allocation3 + $0x8] sm:$0xff]
        %v1334 = vld [vmem:[#allocation3 + $0x10] sm:$0xff]
        %v1335 = vld [vmem:[#allocation3 + $0x18] sm:$0xff]
        %v1336 = vld [vmem:[#allocation3 + $0x20] sm:$0xff]
        %v1337 = vld [vmem:[#allocation3 + $0x28] sm:$0xff]
        %v1338 = vld [vmem:[#allocation3 + $0x30] sm:$0xff]
        %v1339 = vld [vmem:[#allocation3 + $0x38] sm:$0xff]
        %v1340 = vld [vmem:[#allocation3 + $0x40] sm:$0xff]
        %v1341 = vld [vmem:[#allocation3 + $0x48] sm:$0xff]
        %v1342 = vld [vmem:[#allocation3 + $0x50] sm:$0xff]
        %v1343 = vld [vmem:[#allocation3 + $0x58] sm:$0xff]
        %v1344 = vld [vmem:[#allocation3 + $0x60] sm:$0xff]
        %v1345 = vld [vmem:[#allocation3 + $0x68] sm:$0xff]
        %v1346 = vld [vmem:[#allocation3 + $0x70] sm:$0xff]
        %v1347 = vld [vmem:[#allocation3 + $0x78] sm:$0xff]
        %v1348 = vld [vmem:[#allocation3 + $0x80] sm:$0xff]
        %v1349 = vld [vmem:[#allocation3 + $0x88] sm:$0xff]
        %v1350 = vld [vmem:[#allocation3 + $0x90] sm:$0xff]
        %v1352 = vunpack.c.l.b16 %v1331
        %v1353 = vunpack.c.h.b16 %v1331
        %v1354 = vpack.c.b16 %v1352, %v1352
        %v1355 = vpack.c.b16 %v1353, %v1353
        %v1376 = vunpack.c.l.b16 %v1332
        %v1377 = vunpack.c.h.b16 %v1332
        %v1378 = vunpack.c.l.b16 %v1333
        %v1379 = vunpack.c.h.b16 %v1333
        %v1380 = vunpack.c.l.b16 %v1334
        %v1381 = vunpack.c.h.b16 %v1334
        %v1382 = vunpack.c.l.b16 %v1335
        %v1383 = vunpack.c.h.b16 %v1335
        %v1384 = vunpack.c.l.b16 %v1336
        %v1385 = vunpack.c.h.b16 %v1336
        %v1386 = vunpack.c.l.b16 %v1337
        %v1387 = vunpack.c.h.b16 %v1337
        %v1388 = vunpack.c.l.b16 %v1338
        %v1389 = vunpack.c.h.b16 %v1338
        %v1390 = vunpack.c.l.b16 %v1339
        %v1391 = vunpack.c.h.b16 %v1339
        %v1392 = vunpack.c.l.b16 %v1340
        %v1393 = vunpack.c.h.b16 %v1340
        %v1394 = vunpack.c.l.b16 %v1341
        %v1395 = vunpack.c.h.b16 %v1341
        %v1396 = vunpack.c.l.b16 %v1342
        %v1397 = vunpack.c.h.b16 %v1342
        %v1398 = vunpack.c.l.b16 %v1343
        %v1399 = vunpack.c.h.b16 %v1343
        %v1400 = vunpack.c.l.b16 %v1344
        %v1401 = vunpack.c.h.b16 %v1344
        %v1402 = vunpack.c.l.b16 %v1345
        %v1403 = vunpack.c.h.b16 %v1345
        %v1404 = vunpack.c.l.b16 %v1346
        %v1405 = vunpack.c.h.b16 %v1346
        %v1406 = vunpack.c.l.b16 %v1347
        %v1407 = vunpack.c.h.b16 %v1347
        %v1408 = vunpack.c.l.b16 %v1348
        %v1409 = vunpack.c.h.b16 %v1348
        %v1410 = vunpack.c.l.b16 %v1349
        %v1411 = vunpack.c.h.b16 %v1349
        %v1412 = vunpack.c.l.b16 %v1350
        %v1413 = vunpack.c.h.b16 %v1350
        %v1414 = vpack.c.b16 %v1378, %v1376
        %v1415 = vpack.c.b16 %v1379, %v1377
        %v1416 = vpack.c.b16 %v1382, %v1380
        %v1417 = vpack.c.b16 %v1383, %v1381
        %v1418 = vpack.c.b16 %v1386, %v1384
        %v1419 = vpack.c.b16 %v1387, %v1385
        %v1420 = vpack.c.b16 %v1390, %v1388
        %v1421 = vpack.c.b16 %v1391, %v1389
        %v1422 = vpack.c.b16 %v1394, %v1392
        %v1423 = vpack.c.b16 %v1395, %v1393
        %v1424 = vpack.c.b16 %v1398, %v1396
        %v1425 = vpack.c.b16 %v1399, %v1397
        %v1426 = vpack.c.b16 %v1402, %v1400
        %v1427 = vpack.c.b16 %v1403, %v1401
        %v1428 = vpack.c.b16 %v1406, %v1404
        %v1429 = vpack.c.b16 %v1407, %v1405
        %v1430 = vpack.c.b16 %v1410, %v1408
        %v1431 = vpack.c.b16 %v1411, %v1409
        %v1432 = vpack.c.b16 %v1412, %v1412
        %v1433 = vpack.c.b16 %v1413, %v1413
        %v1453 = vsel %vm1010, %v1355, 0
        %v1456 = vsel %vm1014, %v1432, 0
        %v1459 = vsel %vm1014, %v1433, 0
        %1461 = vmatprep.subr.bf16.mxu0 %v1429
        %1462 = vmatpush1.bf16.msra.mxu0 %v1428
        %1463 = vmatprep.subr.bf16.mxu0 %v1427
        %1464 = vmatpush1.bf16.msra.mxu0 %v1426
        %1465 = vmatprep.subr.bf16.mxu0 %v1425
        %1466 = vmatpush1.bf16.msra.mxu0 %v1424
        %1467 = vmatprep.subr.bf16.mxu0 %v1423
        %1468 = vmatpush1.bf16.msra.mxu0 %v1422
        %1469 = vmatprep.subr.bf16.mxu0 %v1421
        %1470 = vmatpush1.bf16.msra.mxu0 %v1420
        %1471 = vmatprep.subr.bf16.mxu0 %v1419
        %1472 = vmatpush1.bf16.msra.mxu0 %v1418
        %1473 = vmatprep.subr.bf16.mxu0 %v1417
        %1474 = vmatpush1.bf16.msra.mxu0 %v1416
        %1475 = vmatprep.subr.bf16.mxu0 %v1415
        %1476 = vmatpush1.bf16.msra.mxu0 %v1414
        %1477 = vmatprep.subr.bf16.mxu0 0
        %1478 = vmatpush2.bf16.msra.mxu0 0
        %1479 = vmatprep.subr.bf16.mxu0 0
        %1480 = vmatpush2.bf16.msra.mxu0 0
        %1481 = vmatprep.subr.bf16.mxu0 0
        %1482 = vmatpush2.bf16.msra.mxu0 0
        %1483 = vmatprep.subr.bf16.mxu0 0
        %1484 = vmatpush2.bf16.msra.mxu0 0
        %1485 = vmatprep.subr.bf16.mxu0 0
        %1486 = vmatpush2.bf16.msra.mxu0 0
        %1487 = vmatprep.subr.bf16.mxu0 0
        %1488 = vmatpush2.bf16.msra.mxu0 0
        %1489 = vmatprep.subr.bf16.mxu0 %v1459
        %1490 = vmatpush2.bf16.msra.mxu0 %v1456
        %1491 = vmatprep.subr.bf16.mxu0 %v1431
        %1492 = vmatpush2.bf16.msra.mxu0 %v1430
        %1493 = vmatprep.mubr.bf16.mxu0 %v1453
        %1494 = vmatmul.mubr.bf16.gmra.mxu0 %v1354
        %v1495 = vpop.f32.mrf.mxu0
        %v1496 = vadd.f32 0.0, %v1495
        %v1497 = vpop.f32.mrf.mxu0
        %v1498 = vadd.f32 0.0, %v1497
        %v1499 = vpop.f32.mrf.mxu0
        %v1500 = vpop.f32.mrf.mxu0
        %1501 = vdwg.mxu0
        %v1502 = vtanh.pop %v1496
        %v1503 = vtanh.pop %v1498
        %v1504 = vsub.f32 1.0, %v1085
        %v1505 = vsub.f32 1.0, %v1087
        %v1506 = vmul.f32 %v1504, %v380
        %v1507 = vmul.f32 %v1505, %v381
        %v1508 = vmul.f32 %v1085, %v1502
        %v1509 = vmul.f32 %v1087, %v1503
        %v1510 = vadd.f32 %v1506, %v1508
        %v1511 = vadd.f32 %v1507, %v1509
        %1512 = vst [vmem:[#allocation2] sm:$0xff] %v1510
        %1513 = vst [vmem:[#allocation2 + $0x8] sm:$0xff] %v1511
        %v1514 = vpack.c.bf16 %v1510, %v1510
        %v1515 = vpack.c.bf16 %v1511, %v1511
        %v1518 = vunpack.c.l.b16 %v1514
        %v1519 = vunpack.c.l.b16 %v1515
        %v1520 = vpack.c.b16 %v1519, %v1518
        %1522 = vst [vmem:[%s337] sm:$0xff] %v1520
        %s1523 = sand.u32 %s165, 1
        %s1524 = scalar_lea.sflag [#allocation6], %s1523
        %s1525 = sand.u32 %s165, 1
        %s1526 = smul.addr %s1525, 8
        %s1527 = scalar_lea.vmem [#allocation13], %s1526
        // Predicated region
        $region65: #{tpu_custom_call.1} parent=39 // pred_check
          %p1528 = pneg %p175
        $region66: #{tpu_custom_call.1} parent=39 // pred_check_branch
          %1530 = sbr.rel (%p1528) target = $region68
        $region67: #{tpu_custom_call.1} parent=39 // pred_region
          %s1532 = ssub.s32 128, 128
          %1533 = vsyncadd %s1524, %s1532
          %s1534 = smul.addr %s31, 2
          %s1535 = smul.addr %s30, 8
          %s1536 = sadd.s32 %s1534, %s1535
          %s1537 = smul.addr %s1536, 64
          %s1538 = scalar_lea.hbm %s5, %s1537
          %s1540 = sshll.u32 %s1527, 4
          %s1541 = int_to_ptr.vmem [resolvable:$true] %s1540
          %1543 = dma.vmem_to_hbm [thread:$0]  %s1541, 128, %s1538, %s1524
        $region68: #{tpu_custom_call.1} parent=39 // pred_fallthru
          _
      $region40: #{tpu_custom_call.1} parent=5 // pred_fallthru
        _
      %p1544 = scmp.le.s32.totalorder 2, %s21
      // Predicated region
      $region69: #{tpu_custom_call.1} parent=5 // pred_check
        %p1545 = pneg %p1544
      $region70: #{tpu_custom_call.1} parent=5 // pred_check_branch
        %1547 = sbr.rel (%p1545) target = $region72
      $region71: #{tpu_custom_call.1} parent=5 // pred_region
        %s1548 = ssub.s32 %s21, 2
        // Predicated region
        $region73: #{tpu_custom_call.1} parent=71 // pred_check
          %p1549 = pneg %p181
        $region74: #{tpu_custom_call.1} parent=71 // pred_check_branch
          %1551 = sbr.rel (%p1549) target = $region76
        $region75: #{tpu_custom_call.1} parent=71 // pred_region
          %s1552 = sand.u32 %s166, 1
          %s1553 = scalar_lea.sflag [#allocation6], %s1552
          %s1554 = sand.u32 %s166, 1
          %s1555 = smul.addr %s1554, 8
          %s1556 = scalar_lea.vmem [#allocation13], %s1555
          %1557 = dma.done %s1553, 128
        $region76: #{tpu_custom_call.1} parent=71 // pred_fallthru
          _
      $region72: #{tpu_custom_call.1} parent=5 // pred_fallthru
        _
    $region6: #{tpu_custom_call.1} parent=1 // loop_footer
      %s25 = sadd.s32 1, %s21
    $region7: #{tpu_custom_call.1} parent=1 // loop_footer_branch
      %20 = sbr.rel target = $region3
    $region8: #{tpu_custom_call.1} parent=1 // loop_exit
      _
    %1558 = vsyncpa [#allocation5], 1
    %s1559 = scalar_lea.sflag [#allocation5], 1
    %1560 = vsyncpa %s1559, 1
    %1561 = vsyncpa [#allocation8], 1
    %s1562 = scalar_lea.sflag [#allocation8], 1
    %1563 = vsyncpa %s1562, 1
    %1564 = vsyncpa [#allocation11], 1
    %1565 = vsyncpa [#allocation6], 1
    %s1566 = scalar_lea.sflag [#allocation6], 1
    %1567 = vsyncpa %s1566, 1

</llo_original>
